<compile_context>
chip_gen: v7x
topology: tpu7x:2x2x1
jax: 0.10.0
libtpu: 0.0.40
codegen_flags: <defaults>
</compile_context>

<pallas_src>
import functools

import jax
import jax.numpy as jnp
from jax.experimental import pallas as pl
from jax.experimental.pallas import tpu as pltpu

LANE = 128


def _round_up(x, m):
    return ((x + m - 1) // m) * m


def actor_kernel(obs_ref, w0_ref, b0_ref, w1_ref, b1_ref, w2_ref, b2_ref,
                 out_ref, *, lane, log_std_min, log_std_max):
    # Layer 0 / 1: bf16 matmul on the MXU, f32 accumulation + bias + ReLU.
    x = obs_ref[...].astype(jnp.bfloat16)                 # in-kernel cast (f32 obs in HBM)
    h = jnp.dot(x, w0_ref[...], preferred_element_type=jnp.float32)
    h = jnp.maximum(h + b0_ref[...], 0.0).astype(jnp.bfloat16)
    h = jnp.dot(h, w1_ref[...], preferred_element_type=jnp.float32)
    h = jnp.maximum(h + b1_ref[...], 0.0).astype(jnp.bfloat16)

    # Output layer: single fused (hidden, 2*lane) dot -> [mu | log_std] heads,
    # each 128-lane padded, then static lane-aligned slices.
    o = jnp.dot(h, w2_ref[...], preferred_element_type=jnp.float32) + b2_ref[...]
    mu = o[:, :lane]
    ls = o[:, lane:2 * lane]

    # tanh-squash of log_std, rescale to bounds, exp -> std (f32, EUP ops).
    t = jnp.tanh(ls)
    log_std = log_std_min + 0.5 * (log_std_max - log_std_min) * (t + 1.0)
    std = jnp.exp(log_std)
    squashed = jnp.tanh(mu)              # SquashedNormal.mean, computed once

    # One fused, lane-dense output slab: [mu | std | tanh(mu)], 128-lane aligned,
    # stored bf16 to halve HBM writeback.
    out_ref[:, 0 * lane:1 * lane] = mu.astype(out_ref.dtype)
    out_ref[:, 1 * lane:2 * lane] = std.astype(out_ref.dtype)
    out_ref[:, 2 * lane:3 * lane] = squashed.astype(out_ref.dtype)


def prepare_params(params, *, action_dim):
    """One-time (out-of-hot-path) parameter prep: bf16 casts + fused/padded head."""
    w0, b0, w1, b1, w2, b2 = params
    hidden = w0.shape[1]
    lane = _round_up(max(action_dim, LANE), LANE)

    w0b = w0.astype(jnp.bfloat16)
    w1b = w1.astype(jnp.bfloat16)
    b0r = b0.reshape(1, -1).astype(jnp.float32)
    b1r = b1.reshape(1, -1).astype(jnp.float32)

    # Fused output weight: [mu head | log_std head], each zero-padded to `lane` lanes.
    w2f = jnp.zeros((hidden, 2 * lane), jnp.bfloat16)
    w2f = w2f.at[:, :action_dim].set(w2[:, :action_dim].astype(jnp.bfloat16))
    w2f = w2f.at[:, lane:lane + action_dim].set(w2[:, action_dim:].astype(jnp.bfloat16))
    b2f = jnp.zeros((1, 2 * lane), jnp.float32)
    b2f = b2f.at[:, :action_dim].set(b2[:action_dim].astype(jnp.float32))
    b2f = b2f.at[:, lane:lane + action_dim].set(b2[action_dim:].astype(jnp.float32))

    return (w0b, b0r, w1b, b1r, w2f, b2f)


@functools.partial(jax.jit,
                   static_argnames=("action_dim", "log_std_bounds", "batch_tile"))
def diag_gaussian_actor_forward(obs, prepped, *, action_dim, log_std_bounds,
                                batch_tile=1024):
    """Returns (mu, std, squashed_mean) of the SquashedNormal distribution (f32)."""
    w0b, b0r, w1b, b1r, w2f, b2f = prepped
    B, obs_dim = obs.shape
    hidden = w0b.shape[1]
    lane = _round_up(max(action_dim, LANE), LANE)
    lo, hi = log_std_bounds

    # Batch tiling: pick tb to minimize pad waste (tb = round_up(cdiv(B, steps), 16)).
    n_steps = int(pl.cdiv(B, batch_tile))
    tb = _round_up(int(pl.cdiv(B, n_steps)), 16)        # 16: bf16 sublane packing
    b_pad = tb * n_steps
    obs_f32 = obs.astype(jnp.float32)
    if b_pad != B:
        obs_f32 = jnp.pad(obs_f32, ((0, b_pad - B), (0, 0)))

    kernel = functools.partial(actor_kernel, lane=lane,
                               log_std_min=float(lo), log_std_max=float(hi))
    const = lambda arr: pl.BlockSpec(arr.shape, lambda i: (0, 0))

    flops = 2 * b_pad * (obs_dim * hidden + hidden * hidden + hidden * 2 * lane)
    bytes_accessed = (obs_f32.size * 4
                      + (w0b.size + w1b.size + w2f.size) * 2
                      + (b0r.size + b1r.size + b2f.size) * 4
                      + b_pad * 3 * lane * 2)

    fused = pl.pallas_call(
        kernel,
        out_shape=jax.ShapeDtypeStruct((b_pad, 3 * lane), jnp.bfloat16),
        grid_spec=pltpu.PrefetchScalarGridSpec(
            num_scalar_prefetch=0,
            grid=(n_steps,),
            in_specs=[
                pl.BlockSpec((tb, obs_dim), lambda i: (i, 0)),   # obs: streamed tiles
                const(w0b), const(b0r),                          # weights: VMEM-resident
                const(w1b), const(b1r),
                const(w2f), const(b2f),
            ],
            out_specs=pl.BlockSpec((tb, 3 * lane), lambda i: (i, 0)),
        ),
        compiler_params=pltpu.CompilerParams(
            dimension_semantics=("parallel",),          # v7x: 2 TCs split the batch
            vmem_limit_bytes=32 * 1024 * 1024,
        ),
        cost_estimate=pl.CostEstimate(
            flops=flops,
            transcendentals=3 * b_pad * lane,
            bytes_accessed=bytes_accessed,
        ),
    )(obs_f32, w0b, b0r, w1b, b1r, w2f, b2f)

    # Tiny head slices fuse into this jit; upcast to f32 for downstream consumers.
    mu = fused[:B, 0 * lane:0 * lane + action_dim].astype(jnp.float32)
    std = fused[:B, 1 * lane:1 * lane + action_dim].astype(jnp.float32)
    mean = fused[:B, 2 * lane:2 * lane + action_dim].astype(jnp.float32)
    return mu, std, mean


def init_params(key, obs_dim, hidden_dim, action_dim):
    """Deterministic orthogonal weight init, zero biases (matches orthogonal_init_)."""
    k0, k1, k2 = jax.random.split(key, 3)
    ortho = jax.nn.initializers.orthogonal()
    # PyTorch Linear weight is (out, in); stored transposed so forward is x @ W.
    w0 = ortho(k0, (hidden_dim, obs_dim), jnp.float32).T
    w1 = ortho(k1, (hidden_dim, hidden_dim), jnp.float32).T
    w2 = ortho(k2, (2 * action_dim, hidden_dim), jnp.float32).T
    b0 = jnp.zeros((hidden_dim,), jnp.float32)
    b1 = jnp.zeros((hidden_dim,), jnp.float32)
    b2 = jnp.zeros((2 * action_dim,), jnp.float32)
    return (w0, b0, w1, b1, w2, b2)


def reference_forward(obs, params, *, action_dim, log_std_bounds,
                      matmul_dtype=jnp.float32):
    """Pure-JAX reference. matmul_dtype=bf16 mirrors the kernel's MXU precision."""
    w0, b0, w1, b1, w2, b2 = params
    lo, hi = log_std_bounds

    def dot(x, w):
        return jnp.dot(x.astype(matmul_dtype), w.astype(matmul_dtype),
                       preferred_element_type=jnp.float32)

    h = jnp.maximum(dot(obs, w0) + b0, 0.0)
    h = jnp.maximum(dot(h, w1) + b1, 0.0)
    out = dot(h, w2) + b2
    mu, log_std = out[:, :action_dim], out[:, action_dim:]
    log_std = jnp.tanh(log_std)
    log_std = lo + 0.5 * (hi - lo) * (log_std + 1.0)
    return mu, jnp.exp(log_std), jnp.tanh(mu)


if __name__ == "__main__":
    obs_dim, action_dim, hidden_dim = 32, 8, 32
    log_std_bounds = (-10.0, 2.0)
    batch = 400

    key = jax.random.PRNGKey(0)
    k_obs, k_params = jax.random.split(key)
    obs = jax.random.normal(k_obs, (batch, obs_dim), jnp.float32)
    params = init_params(k_params, obs_dim, hidden_dim, action_dim)
    prepped = prepare_params(params, action_dim=action_dim)   # hoisted, one-time prep

    # References: bf16-matmul (apples-to-apples) and full-f32 (loose sanity).
    mu_r, std_r, mean_r = reference_forward(
        obs, params, action_dim=action_dim, log_std_bounds=log_std_bounds,
        matmul_dtype=jnp.bfloat16)
    mu_f, std_f, mean_f = reference_forward(
        obs, params, action_dim=action_dim, log_std_bounds=log_std_bounds,
        matmul_dtype=jnp.float32)

    # Single-step grid (default batch_tile) and multi-step grid with batch padding.
    for bt in (1024, 192):
        mu, std, mean = diag_gaussian_actor_forward(
            obs, prepped, action_dim=action_dim, log_std_bounds=log_std_bounds,
            batch_tile=bt)
        jax.block_until_ready((mu, std, mean))

        # bf16 MXU + bf16 output storage -> ~0.4% relative rounding vs bf16-matmul ref.
        assert jnp.allclose(mu, mu_r, atol=2e-2, rtol=2e-2)
        assert jnp.allclose(std, std_r, atol=2e-2, rtol=5e-2)
        assert jnp.allclose(mean, mean_r, atol=2e-2, rtol=2e-2)

        # Loose sanity check against the full-f32 reference.
        assert jnp.allclose(mu, mu_f, atol=1e-1, rtol=2e-1)
        assert jnp.allclose(std, std_f, atol=1e-1, rtol=2e-1)
        assert jnp.allclose(mean, mean_f, atol=1e-1, rtol=2e-1)

    # TODO(synk): dist.rsample()/log_prob (stochastic path of SquashedNormal, used by
    # sample()) is not part of forward(); only mu/std/tanh(mu) are produced here.
    print("KERNEL_OK")
</pallas_src>

<mosaic_0001>
module attributes {stable_mosaic.version = 11 : i64} {
  func.func @actor_kernel(%arg0: i32, %arg1: memref<400x32xf32, #tpu.memory_space<vmem>>, %arg2: memref<32x32xbf16, #tpu.memory_space<vmem>>, %arg3: memref<1x32xf32, #tpu.memory_space<vmem>>, %arg4: memref<32x32xbf16, #tpu.memory_space<vmem>>, %arg5: memref<1x32xf32, #tpu.memory_space<vmem>>, %arg6: memref<32x256xbf16, #tpu.memory_space<vmem>>, %arg7: memref<1x256xf32, #tpu.memory_space<vmem>>, %arg8: memref<400x384xbf16, #tpu.memory_space<vmem>>) attributes {dimension_semantics = [#tpu.dimension_semantics<parallel>], iteration_bounds = array<i64: 1>, scalar_prefetch = 0 : i64, scratch_operands = 0 : i64, tpu.core_type = #tpu.core_type<tc>, window_params = [{transform_indices = @transform_0, window_bounds = array<i64: 400, 32>}, {pipeline_mode = #tpu.pipeline_mode<synchronous>, transform_indices = @transform_1, window_bounds = array<i64: 32, 32>}, {pipeline_mode = #tpu.pipeline_mode<synchronous>, transform_indices = @transform_2, window_bounds = array<i64: 1, 32>}, {pipeline_mode = #tpu.pipeline_mode<synchronous>, transform_indices = @transform_3, window_bounds = array<i64: 32, 32>}, {pipeline_mode = #tpu.pipeline_mode<synchronous>, transform_indices = @transform_4, window_bounds = array<i64: 1, 32>}, {pipeline_mode = #tpu.pipeline_mode<synchronous>, transform_indices = @transform_5, window_bounds = array<i64: 32, 256>}, {pipeline_mode = #tpu.pipeline_mode<synchronous>, transform_indices = @transform_6, window_bounds = array<i64: 1, 256>}, {transform_indices = @transform_7, window_bounds = array<i64: 400, 384>}]} {
    %c0 = arith.constant 0 : index
    %c0_0 = arith.constant 0 : index
    %0 = vector.load %arg1[%c0, %c0_0] : memref<400x32xf32, #tpu.memory_space<vmem>>, vector<400x32xf32>
    %1 = arith.truncf %0 : vector<400x32xf32> to vector<400x32xbf16>
    %c0_1 = arith.constant 0 : index
    %c0_2 = arith.constant 0 : index
    %2 = vector.load %arg2[%c0_1, %c0_2] : memref<32x32xbf16, #tpu.memory_space<vmem>>, vector<32x32xbf16>
    %cst = arith.constant dense<0.000000e+00> : vector<400x32xf32>
    %3 = tpu.matmul %1, %2, %cst {dimension_numbers = #tpu.dot_dimension_numbers<[1], [0], [0], [1], [0, 0, 1, 1], [], []>} : vector<400x32xbf16>, vector<32x32xbf16>, vector<400x32xf32> -> vector<400x32xf32>
    %c0_3 = arith.constant 0 : index
    %c0_4 = arith.constant 0 : index
    %4 = vector.load %arg3[%c0_3, %c0_4] : memref<1x32xf32, #tpu.memory_space<vmem>>, vector<1x32xf32>
    %5 = vector.broadcast %4 : vector<1x32xf32> to vector<400x32xf32>
    %6 = arith.addf %3, %5 : vector<400x32xf32>
    %cst_5 = arith.constant 0.000000e+00 : f32
    %7 = vector.broadcast %cst_5 : f32 to vector<400x32xf32>
    %8 = arith.maximumf %6, %7 : vector<400x32xf32>
    %9 = arith.truncf %8 : vector<400x32xf32> to vector<400x32xbf16>
    %c0_6 = arith.constant 0 : index
    %c0_7 = arith.constant 0 : index
    %10 = vector.load %arg4[%c0_6, %c0_7] : memref<32x32xbf16, #tpu.memory_space<vmem>>, vector<32x32xbf16>
    %cst_8 = arith.constant dense<0.000000e+00> : vector<400x32xf32>
    %11 = tpu.matmul %9, %10, %cst_8 {dimension_numbers = #tpu.dot_dimension_numbers<[1], [0], [0], [1], [0, 0, 1, 1], [], []>} : vector<400x32xbf16>, vector<32x32xbf16>, vector<400x32xf32> -> vector<400x32xf32>
    %c0_9 = arith.constant 0 : index
    %c0_10 = arith.constant 0 : index
    %12 = vector.load %arg5[%c0_9, %c0_10] : memref<1x32xf32, #tpu.memory_space<vmem>>, vector<1x32xf32>
    %13 = vector.broadcast %12 : vector<1x32xf32> to vector<400x32xf32>
    %14 = arith.addf %11, %13 : vector<400x32xf32>
    %cst_11 = arith.constant 0.000000e+00 : f32
    %15 = vector.broadcast %cst_11 : f32 to vector<400x32xf32>
    %16 = arith.maximumf %14, %15 : vector<400x32xf32>
    %17 = arith.truncf %16 : vector<400x32xf32> to vector<400x32xbf16>
    %c0_12 = arith.constant 0 : index
    %c0_13 = arith.constant 0 : index
    %18 = vector.load %arg6[%c0_12, %c0_13] : memref<32x256xbf16, #tpu.memory_space<vmem>>, vector<32x256xbf16>
    %cst_14 = arith.constant dense<0.000000e+00> : vector<400x256xf32>
    %19 = tpu.matmul %17, %18, %cst_14 {dimension_numbers = #tpu.dot_dimension_numbers<[1], [0], [0], [1], [0, 0, 1, 1], [], []>} : vector<400x32xbf16>, vector<32x256xbf16>, vector<400x256xf32> -> vector<400x256xf32>
    %c0_15 = arith.constant 0 : index
    %c0_16 = arith.constant 0 : index
    %20 = vector.load %arg7[%c0_15, %c0_16] : memref<1x256xf32, #tpu.memory_space<vmem>>, vector<1x256xf32>
    %21 = vector.broadcast %20 : vector<1x256xf32> to vector<400x256xf32>
    %22 = arith.addf %19, %21 : vector<400x256xf32>
    %23 = vector.extract_strided_slice %22 {offsets = [0, 0], sizes = [400, 128], strides = [1, 1]} : vector<400x256xf32> to vector<400x128xf32>
    %24 = vector.extract_strided_slice %22 {offsets = [0, 128], sizes = [400, 128], strides = [1, 1]} : vector<400x256xf32> to vector<400x128xf32>
    %25 = math.tanh %24 : vector<400x128xf32>
    %cst_17 = arith.constant 1.000000e+00 : f32
    %26 = vector.broadcast %cst_17 : f32 to vector<400x128xf32>
    %27 = arith.addf %25, %26 : vector<400x128xf32>
    %cst_18 = arith.constant 6.000000e+00 : f32
    %28 = vector.broadcast %cst_18 : f32 to vector<400x128xf32>
    %29 = arith.mulf %28, %27 : vector<400x128xf32>
    %cst_19 = arith.constant -1.000000e+01 : f32
    %30 = vector.broadcast %cst_19 : f32 to vector<400x128xf32>
    %31 = arith.addf %30, %29 : vector<400x128xf32>
    %32 = math.exp %31 : vector<400x128xf32>
    %33 = math.tanh %23 : vector<400x128xf32>
    %34 = arith.truncf %23 : vector<400x128xf32> to vector<400x128xbf16>
    %c0_20 = arith.constant 0 : index
    %c0_21 = arith.constant 0 : index
    %35 = vector.load %arg8[%c0_20, %c0_21] : memref<400x384xbf16, #tpu.memory_space<vmem>>, vector<400x128xbf16>
    tpu.vector_store %arg8[%c0_20, %c0_21], %34 {strides = array<i32>} : memref<400x384xbf16, #tpu.memory_space<vmem>>, vector<400x128xbf16>,
    %36 = arith.truncf %32 : vector<400x128xf32> to vector<400x128xbf16>
    %c0_22 = arith.constant 0 : index
    %c128 = arith.constant 128 : index
    %37 = vector.load %arg8[%c0_22, %c128] : memref<400x384xbf16, #tpu.memory_space<vmem>>, vector<400x128xbf16>
    tpu.vector_store %arg8[%c0_22, %c128], %36 {strides = array<i32>} : memref<400x384xbf16, #tpu.memory_space<vmem>>, vector<400x128xbf16>,
    %38 = arith.truncf %33 : vector<400x128xf32> to vector<400x128xbf16>
    %c0_23 = arith.constant 0 : index
    %c256 = arith.constant 256 : index
    %39 = vector.load %arg8[%c0_23, %c256] : memref<400x384xbf16, #tpu.memory_space<vmem>>, vector<400x128xbf16>
    tpu.vector_store %arg8[%c0_23, %c256], %38 {strides = array<i32>} : memref<400x384xbf16, #tpu.memory_space<vmem>>, vector<400x128xbf16>,
    return
  }
  func.func @transform_0(%arg0: i32) -> (i32, i32) {
    %c0_i32 = arith.constant 0 : i32
    %c0_i32_0 = arith.constant 0 : i32
    return %arg0, %c0_i32 : i32, i32
  }
  func.func @transform_1(%arg0: i32) -> (i32, i32) {
    %c0_i32 = arith.constant 0 : i32
    %c0_i32_0 = arith.constant 0 : i32
    %c0_i32_1 = arith.constant 0 : i32
    return %c0_i32, %c0_i32_0 : i32, i32
  }
  func.func @transform_2(%arg0: i32) -> (i32, i32) {
    %c0_i32 = arith.constant 0 : i32
    %c0_i32_0 = arith.constant 0 : i32
    %c0_i32_1 = arith.constant 0 : i32
    return %c0_i32, %c0_i32_0 : i32, i32
  }
  func.func @transform_3(%arg0: i32) -> (i32, i32) {
    %c0_i32 = arith.constant 0 : i32
    %c0_i32_0 = arith.constant 0 : i32
    %c0_i32_1 = arith.constant 0 : i32
    return %c0_i32, %c0_i32_0 : i32, i32
  }
  func.func @transform_4(%arg0: i32) -> (i32, i32) {
    %c0_i32 = arith.constant 0 : i32
    %c0_i32_0 = arith.constant 0 : i32
    %c0_i32_1 = arith.constant 0 : i32
    return %c0_i32, %c0_i32_0 : i32, i32
  }
  func.func @transform_5(%arg0: i32) -> (i32, i32) {
    %c0_i32 = arith.constant 0 : i32
    %c0_i32_0 = arith.constant 0 : i32
    %c0_i32_1 = arith.constant 0 : i32
    return %c0_i32, %c0_i32_0 : i32, i32
  }
  func.func @transform_6(%arg0: i32) -> (i32, i32) {
    %c0_i32 = arith.constant 0 : i32
    %c0_i32_0 = arith.constant 0 : i32
    %c0_i32_1 = arith.constant 0 : i32
    return %c0_i32, %c0_i32_0 : i32, i32
  }
  func.func @transform_7(%arg0: i32) -> (i32, i32) {
    %c0_i32 = arith.constant 0 : i32
    %c0_i32_0 = arith.constant 0 : i32
    return %arg0, %c0_i32 : i32, i32
  }
}

</mosaic_0001>

<llo_original>
// kernel: diag_gaussian_actor_forward.1
$region0: #{diag_gaussian_actor_forward.1}
  #allocation0 [shape = 'u32[]', space=smem, size = 0x4, offset = 0x4, fixed_abs, tag = 'smem constant byte address 0x4 - core index']
  #allocation1 [shape = 'u32[144,128]{1,0:T(1,128)}', space=vmem, size = 0x12000, scoped, tag = 'internal scratch']
  %s0 = inlined_call_operand.vmem [shape: f32[400,32], index: 0, kind: input, shape index: {}]
  %s1 = inlined_call_operand.vmem [shape: bf16[32,32], index: 1, kind: input, shape index: {}]
  %s2 = inlined_call_operand.vmem [shape: f32[1,32], index: 2, kind: input, shape index: {}]
  %s3 = inlined_call_operand.vmem [shape: bf16[32,32], index: 3, kind: input, shape index: {}]
  %s4 = inlined_call_operand.vmem [shape: f32[1,32], index: 4, kind: input, shape index: {}]
  %s5 = inlined_call_operand.vmem [shape: bf16[32,256], index: 5, kind: input, shape index: {}]
  %s6 = inlined_call_operand.vmem [shape: f32[1,256], index: 6, kind: input, shape index: {}]
  %s7 = inlined_call_operand.vmem [shape: bf16[400,384], index: 7, kind: output, shape index: {}]
  %s8 = sld [smem:[#allocation0]]
  $region38: #{diag_gaussian_actor_forward.1} parent=0
    _
  %s10 = ssub.s32 1, %s8
  %s11 = scalar_select 0, %s10, %s8
  // Predicated region
  $region2: #{diag_gaussian_actor_forward.1} parent=0 // pred_check
    _
  $region3: #{diag_gaussian_actor_forward.1} parent=0 // pred_check_branch
    %13 = sbr.rel (0) target = $region5
  $region4: #{diag_gaussian_actor_forward.1} parent=0 // pred_region
    _
  $region5: #{diag_gaussian_actor_forward.1} parent=0 // pred_fallthru
    _
  // Predicated region
  $region6: #{diag_gaussian_actor_forward.1} parent=0 // pred_check
    _
  $region7: #{diag_gaussian_actor_forward.1} parent=0 // pred_check_branch
    %15 = sbr.rel (0) target = $region9
  $region8: #{diag_gaussian_actor_forward.1} parent=0 // pred_region
    _
  $region9: #{diag_gaussian_actor_forward.1} parent=0 // pred_fallthru
    _
  // Predicated region
  $region10: #{diag_gaussian_actor_forward.1} parent=0 // pred_check
    _
  $region11: #{diag_gaussian_actor_forward.1} parent=0 // pred_check_branch
    %17 = sbr.rel (0) target = $region13
  $region12: #{diag_gaussian_actor_forward.1} parent=0 // pred_region
    _
  $region13: #{diag_gaussian_actor_forward.1} parent=0 // pred_fallthru
    _
  // Predicated region
  $region14: #{diag_gaussian_actor_forward.1} parent=0 // pred_check
    _
  $region15: #{diag_gaussian_actor_forward.1} parent=0 // pred_check_branch
    %19 = sbr.rel (0) target = $region17
  $region16: #{diag_gaussian_actor_forward.1} parent=0 // pred_region
    _
  $region17: #{diag_gaussian_actor_forward.1} parent=0 // pred_fallthru
    _
  // Predicated region
  $region18: #{diag_gaussian_actor_forward.1} parent=0 // pred_check
    _
  $region19: #{diag_gaussian_actor_forward.1} parent=0 // pred_check_branch
    %21 = sbr.rel (0) target = $region21
  $region20: #{diag_gaussian_actor_forward.1} parent=0 // pred_region
    _
  $region21: #{diag_gaussian_actor_forward.1} parent=0 // pred_fallthru
    _
  // Predicated region
  $region22: #{diag_gaussian_actor_forward.1} parent=0 // pred_check
    _
  $region23: #{diag_gaussian_actor_forward.1} parent=0 // pred_check_branch
    %23 = sbr.rel (0) target = $region25
  $region24: #{diag_gaussian_actor_forward.1} parent=0 // pred_region
    _
  $region25: #{diag_gaussian_actor_forward.1} parent=0 // pred_fallthru
    _
  // Predicated region
  $region26: #{diag_gaussian_actor_forward.1} parent=0 // pred_check
    _
  $region27: #{diag_gaussian_actor_forward.1} parent=0 // pred_check_branch
    %25 = sbr.rel (0) target = $region29
  $region28: #{diag_gaussian_actor_forward.1} parent=0 // pred_region
    _
  $region29: #{diag_gaussian_actor_forward.1} parent=0 // pred_fallthru
    _
  %v27 = vld [vmem:[%s0] sm:$0xff]
  %v28 = vld [vmem:[%s0 + $0x8] sm:$0xff]
  %v29 = vld [vmem:[%s0 + $0x10] sm:$0xff]
  %v30 = vld [vmem:[%s0 + $0x18] sm:$0xff]
  %v31 = vld [vmem:[%s0 + $0x20] sm:$0xff]
  %v32 = vld [vmem:[%s0 + $0x28] sm:$0xff]
  %v33 = vld [vmem:[%s0 + $0x30] sm:$0xff]
  %v34 = vld [vmem:[%s0 + $0x38] sm:$0xff]
  %v35 = vld [vmem:[%s0 + $0x40] sm:$0xff]
  %v36 = vld [vmem:[%s0 + $0x48] sm:$0xff]
  %v37 = vld [vmem:[%s0 + $0x50] sm:$0xff]
  %v38 = vld [vmem:[%s0 + $0x58] sm:$0xff]
  %v39 = vld [vmem:[%s0 + $0x60] sm:$0xff]
  %v40 = vld [vmem:[%s0 + $0x68] sm:$0xff]
  %v41 = vld [vmem:[%s0 + $0x70] sm:$0xff]
  %v42 = vld [vmem:[%s0 + $0x78] sm:$0xff]
  %v43 = vld [vmem:[%s0 + $0x80] sm:$0xff]
  %v44 = vld [vmem:[%s0 + $0x88] sm:$0xff]
  %v45 = vld [vmem:[%s0 + $0x90] sm:$0xff]
  %v46 = vld [vmem:[%s0 + $0x98] sm:$0xff]
  %v47 = vld [vmem:[%s0 + $0xa0] sm:$0xff]
  %v48 = vld [vmem:[%s0 + $0xa8] sm:$0xff]
  %v49 = vld [vmem:[%s0 + $0xb0] sm:$0xff]
  %v50 = vld [vmem:[%s0 + $0xb8] sm:$0xff]
  %v51 = vld [vmem:[%s0 + $0xc0] sm:$0xff]
  %v52 = vld [vmem:[%s0 + $0xc8] sm:$0xff]
  %v53 = vld [vmem:[%s0 + $0xd0] sm:$0xff]
  %v54 = vld [vmem:[%s0 + $0xd8] sm:$0xff]
  %v55 = vld [vmem:[%s0 + $0xe0] sm:$0xff]
  %v56 = vld [vmem:[%s0 + $0xe8] sm:$0xff]
  %v57 = vld [vmem:[%s0 + $0xf0] sm:$0xff]
  %v58 = vld [vmem:[%s0 + $0xf8] sm:$0xff]
  %v59 = vld [vmem:[%s0 + $0x100] sm:$0xff]
  %v60 = vld [vmem:[%s0 + $0x108] sm:$0xff]
  %v61 = vld [vmem:[%s0 + $0x110] sm:$0xff]
  %v62 = vld [vmem:[%s0 + $0x118] sm:$0xff]
  %v63 = vld [vmem:[%s0 + $0x120] sm:$0xff]
  %v64 = vld [vmem:[%s0 + $0x128] sm:$0xff]
  %v65 = vld [vmem:[%s0 + $0x130] sm:$0xff]
  %v66 = vld [vmem:[%s0 + $0x138] sm:$0xff]
  %v67 = vld [vmem:[%s0 + $0x140] sm:$0xff]
  %v68 = vld [vmem:[%s0 + $0x148] sm:$0xff]
  %v69 = vld [vmem:[%s0 + $0x150] sm:$0xff]
  %v70 = vld [vmem:[%s0 + $0x158] sm:$0xff]
  %v71 = vld [vmem:[%s0 + $0x160] sm:$0xff]
  %v72 = vld [vmem:[%s0 + $0x168] sm:$0xff]
  %v73 = vld [vmem:[%s0 + $0x170] sm:$0xff]
  %v74 = vld [vmem:[%s0 + $0x178] sm:$0xff]
  %v75 = vld [vmem:[%s0 + $0x180] sm:$0xff]
  %v76 = vld [vmem:[%s0 + $0x188] sm:$0xff]
  %v77 = vpack.c.bf16 %v28, %v27
  %v78 = vpack.c.bf16 %v30, %v29
  %v79 = vpack.c.bf16 %v32, %v31
  %v80 = vpack.c.bf16 %v34, %v33
  %v81 = vpack.c.bf16 %v36, %v35
  %v82 = vpack.c.bf16 %v38, %v37
  %v83 = vpack.c.bf16 %v40, %v39
  %v84 = vpack.c.bf16 %v42, %v41
  %v85 = vpack.c.bf16 %v44, %v43
  %v86 = vpack.c.bf16 %v46, %v45
  %v87 = vpack.c.bf16 %v48, %v47
  %v88 = vpack.c.bf16 %v50, %v49
  %v89 = vpack.c.bf16 %v52, %v51
  %v90 = vpack.c.bf16 %v54, %v53
  %v91 = vpack.c.bf16 %v56, %v55
  %v92 = vpack.c.bf16 %v58, %v57
  %v93 = vpack.c.bf16 %v60, %v59
  %v94 = vpack.c.bf16 %v62, %v61
  %v95 = vpack.c.bf16 %v64, %v63
  %v96 = vpack.c.bf16 %v66, %v65
  %v97 = vpack.c.bf16 %v68, %v67
  %v98 = vpack.c.bf16 %v70, %v69
  %v99 = vpack.c.bf16 %v72, %v71
  %v100 = vpack.c.bf16 %v74, %v73
  %v101 = vpack.c.bf16 %v76, %v75
  %v102 = vld [vmem:[%s1] sm:$0xf]
  %v103 = vld [vmem:[%s1 + $0x4] sm:$0xf]
  %v104 = vld [vmem:[%s1 + $0x8] sm:$0xf]
  %v105 = vld [vmem:[%s1 + $0xc] sm:$0xf]
  %v106 = vld [vmem:[%s2] sm:$0x1]
  %v108 = vlaneseq
  %v109 = vshrl.u32 %v108, 7
  %v110 = vsub.s32 0, %v109
  %v111 = vrot.slane %v106, %v110
  %v117 = vunpack.c.l.b16 %v102
  %v118 = vunpack.c.l.b16 %v103
  %v119 = vunpack.c.l.b16 %v104
  %v120 = vunpack.c.l.b16 %v105
  %v121 = vpack.c.b16 %v118, %v117
  %v122 = vpack.c.b16 %v120, %v119
  %vm125 = vcmask 261120
  %v127 = vsel %vm125, %v77, 0
  %v130 = vsel %vm125, %v78, 0
  %v133 = vsel %vm125, %v79, 0
  %v136 = vsel %vm125, %v80, 0
  %v139 = vsel %vm125, %v81, 0
  %v142 = vsel %vm125, %v82, 0
  %v145 = vsel %vm125, %v83, 0
  %v148 = vsel %vm125, %v84, 0
  %v151 = vsel %vm125, %v85, 0
  %v154 = vsel %vm125, %v86, 0
  %v157 = vsel %vm125, %v87, 0
  %v160 = vsel %vm125, %v88, 0
  %v163 = vsel %vm125, %v89, 0
  %v166 = vsel %vm125, %v90, 0
  %v169 = vsel %vm125, %v91, 0
  %v172 = vsel %vm125, %v92, 0
  %v175 = vsel %vm125, %v93, 0
  %v178 = vsel %vm125, %v94, 0
  %v181 = vsel %vm125, %v95, 0
  %v184 = vsel %vm125, %v96, 0
  %v187 = vsel %vm125, %v97, 0
  %v190 = vsel %vm125, %v98, 0
  %v193 = vsel %vm125, %v99, 0
  %v196 = vsel %vm125, %v100, 0
  %v199 = vsel %vm125, %v101, 0
  %201 = vmatprep.subr.bf16.mxu0 0
  %202 = vmatpush1.bf16.msra.mxu0 %v121
  %203 = vmatprep.subr.bf16.mxu0 0
  %204 = vmatpush1.bf16.msra.mxu0 %v122
  %205 = vmatprep.subr.bf16.mxu0 0
  %206 = vmatpush1.bf16.msra.mxu0 0
  %207 = vmatprep.subr.bf16.mxu0 0
  %208 = vmatpush1.bf16.msra.mxu0 0
  %209 = vmatprep.subr.bf16.mxu0 0
  %210 = vmatpush1.bf16.msra.mxu0 0
  %211 = vmatprep.subr.bf16.mxu0 0
  %212 = vmatpush1.bf16.msra.mxu0 0
  %213 = vmatprep.subr.bf16.mxu0 0
  %214 = vmatpush1.bf16.msra.mxu0 0
  %215 = vmatprep.subr.bf16.mxu0 0
  %216 = vmatpush1.bf16.msra.mxu0 0
  %217 = vmatprep.subr.bf16.mxu0 0
  %218 = vmatpush1.bf16.msra.mxu0 0
  %219 = vmatprep.subr.bf16.mxu0 0
  %220 = vmatpush1.bf16.msra.mxu0 0
  %221 = vmatprep.subr.bf16.mxu0 0
  %222 = vmatpush1.bf16.msra.mxu0 0
  %223 = vmatprep.subr.bf16.mxu0 0
  %224 = vmatpush1.bf16.msra.mxu0 0
  %225 = vmatprep.subr.bf16.mxu0 0
  %226 = vmatpush1.bf16.msra.mxu0 0
  %227 = vmatprep.subr.bf16.mxu0 0
  %228 = vmatpush1.bf16.msra.mxu0 0
  %229 = vmatprep.subr.bf16.mxu0 0
  %230 = vmatpush1.bf16.msra.mxu0 0
  %231 = vmatprep.subr.bf16.mxu0 0
  %232 = vmatpush1.bf16.msra.mxu0 0
  %233 = vmatprep.mubr.bf16.mxu0 0
  %234 = vmatmul.mubr.bf16.gmra.mrb[0].mxu0 %v127
  %v235 = vpop.f32.mrb[0].mxu0
  %v236 = vadd.f32 %v111, %v235
  %v237 = vpop.f32.mrb[0].mxu0
  %v238 = vpop.f32.mrb[0].mxu0
  %v239 = vadd.f32 %v111, %v238
  %v240 = vpop.f32.mrb[0].mxu0
  %241 = vmatprep.mubr.bf16.mxu0 0
  %242 = vmatmul.mubr.bf16.gmra.mrb[0].mxu0 %v130
  %v243 = vpop.f32.mrb[0].mxu0
  %v244 = vadd.f32 %v111, %v243
  %v245 = vpop.f32.mrb[0].mxu0
  %v246 = vpop.f32.mrb[0].mxu0
  %v247 = vadd.f32 %v111, %v246
  %v248 = vpop.f32.mrb[0].mxu0
  %249 = vmatprep.mubr.bf16.mxu0 0
  %250 = vmatmul.mubr.bf16.gmra.mrb[0].mxu0 %v133
  %v251 = vpop.f32.mrb[0].mxu0
  %v252 = vadd.f32 %v111, %v251
  %v253 = vpop.f32.mrb[0].mxu0
  %v254 = vpop.f32.mrb[0].mxu0
  %v255 = vadd.f32 %v111, %v254
  %v256 = vpop.f32.mrb[0].mxu0
  %257 = vmatprep.mubr.bf16.mxu0 0
  %258 = vmatmul.mubr.bf16.gmra.mrb[0].mxu0 %v136
  %v259 = vpop.f32.mrb[0].mxu0
  %v260 = vadd.f32 %v111, %v259
  %v261 = vpop.f32.mrb[0].mxu0
  %v262 = vpop.f32.mrb[0].mxu0
  %v263 = vadd.f32 %v111, %v262
  %v264 = vpop.f32.mrb[0].mxu0
  %265 = vmatprep.mubr.bf16.mxu0 0
  %266 = vmatmul.mubr.bf16.gmra.mrb[0].mxu0 %v139
  %v267 = vpop.f32.mrb[0].mxu0
  %v268 = vadd.f32 %v111, %v267
  %v269 = vpop.f32.mrb[0].mxu0
  %v270 = vpop.f32.mrb[0].mxu0
  %v271 = vadd.f32 %v111, %v270
  %v272 = vpop.f32.mrb[0].mxu0
  %273 = vmatprep.mubr.bf16.mxu0 0
  %274 = vmatmul.mubr.bf16.gmra.mrb[0].mxu0 %v142
  %v275 = vpop.f32.mrb[0].mxu0
  %v276 = vadd.f32 %v111, %v275
  %v277 = vpop.f32.mrb[0].mxu0
  %v278 = vpop.f32.mrb[0].mxu0
  %v279 = vadd.f32 %v111, %v278
  %v280 = vpop.f32.mrb[0].mxu0
  %281 = vmatprep.mubr.bf16.mxu0 0
  %282 = vmatmul.mubr.bf16.gmra.mrb[0].mxu0 %v145
  %v283 = vpop.f32.mrb[0].mxu0
  %v284 = vadd.f32 %v111, %v283
  %v285 = vpop.f32.mrb[0].mxu0
  %v286 = vpop.f32.mrb[0].mxu0
  %v287 = vadd.f32 %v111, %v286
  %v288 = vpop.f32.mrb[0].mxu0
  %289 = vmatprep.mubr.bf16.mxu0 0
  %290 = vmatmul.mubr.bf16.gmra.mrb[0].mxu0 %v148
  %v291 = vpop.f32.mrb[0].mxu0
  %v292 = vadd.f32 %v111, %v291
  %v293 = vpop.f32.mrb[0].mxu0
  %v294 = vpop.f32.mrb[0].mxu0
  %v295 = vadd.f32 %v111, %v294
  %v296 = vpop.f32.mrb[0].mxu0
  %297 = vmatprep.mubr.bf16.mxu0 0
  %298 = vmatmul.mubr.bf16.gmra.mrb[0].mxu0 %v151
  %v299 = vpop.f32.mrb[0].mxu0
  %v300 = vadd.f32 %v111, %v299
  %v301 = vpop.f32.mrb[0].mxu0
  %v302 = vpop.f32.mrb[0].mxu0
  %v303 = vadd.f32 %v111, %v302
  %v304 = vpop.f32.mrb[0].mxu0
  %305 = vmatprep.mubr.bf16.mxu0 0
  %306 = vmatmul.mubr.bf16.gmra.mrb[0].mxu0 %v154
  %v307 = vpop.f32.mrb[0].mxu0
  %v308 = vadd.f32 %v111, %v307
  %v309 = vpop.f32.mrb[0].mxu0
  %v310 = vpop.f32.mrb[0].mxu0
  %v311 = vadd.f32 %v111, %v310
  %v312 = vpop.f32.mrb[0].mxu0
  %313 = vmatprep.mubr.bf16.mxu0 0
  %314 = vmatmul.mubr.bf16.gmra.mrb[0].mxu0 %v157
  %v315 = vpop.f32.mrb[0].mxu0
  %v316 = vadd.f32 %v111, %v315
  %v317 = vpop.f32.mrb[0].mxu0
  %v318 = vpop.f32.mrb[0].mxu0
  %v319 = vadd.f32 %v111, %v318
  %v320 = vpop.f32.mrb[0].mxu0
  %321 = vmatprep.mubr.bf16.mxu0 0
  %322 = vmatmul.mubr.bf16.gmra.mrb[0].mxu0 %v160
  %v323 = vpop.f32.mrb[0].mxu0
  %v324 = vadd.f32 %v111, %v323
  %v325 = vpop.f32.mrb[0].mxu0
  %v326 = vpop.f32.mrb[0].mxu0
  %v327 = vadd.f32 %v111, %v326
  %v328 = vpop.f32.mrb[0].mxu0
  %329 = vmatprep.mubr.bf16.mxu0 0
  %330 = vmatmul.mubr.bf16.gmra.mrb[0].mxu0 %v163
  %v331 = vpop.f32.mrb[0].mxu0
  %v332 = vadd.f32 %v111, %v331
  %v333 = vpop.f32.mrb[0].mxu0
  %v334 = vpop.f32.mrb[0].mxu0
  %v335 = vadd.f32 %v111, %v334
  %v336 = vpop.f32.mrb[0].mxu0
  %337 = vmatprep.mubr.bf16.mxu0 0
  %338 = vmatmul.mubr.bf16.gmra.mrb[0].mxu0 %v166
  %v339 = vpop.f32.mrb[0].mxu0
  %v340 = vadd.f32 %v111, %v339
  %v341 = vpop.f32.mrb[0].mxu0
  %v342 = vpop.f32.mrb[0].mxu0
  %v343 = vadd.f32 %v111, %v342
  %v344 = vpop.f32.mrb[0].mxu0
  %345 = vmatprep.mubr.bf16.mxu0 0
  %346 = vmatmul.mubr.bf16.gmra.mrb[0].mxu0 %v169
  %v347 = vpop.f32.mrb[0].mxu0
  %v348 = vadd.f32 %v111, %v347
  %v349 = vpop.f32.mrb[0].mxu0
  %v350 = vpop.f32.mrb[0].mxu0
  %v351 = vadd.f32 %v111, %v350
  %v352 = vpop.f32.mrb[0].mxu0
  %353 = vmatprep.mubr.bf16.mxu0 0
  %354 = vmatmul.mubr.bf16.gmra.mrb[0].mxu0 %v172
  %v355 = vpop.f32.mrb[0].mxu0
  %v356 = vadd.f32 %v111, %v355
  %v357 = vpop.f32.mrb[0].mxu0
  %v358 = vpop.f32.mrb[0].mxu0
  %v359 = vadd.f32 %v111, %v358
  %v360 = vpop.f32.mrb[0].mxu0
  %361 = vmatprep.mubr.bf16.mxu0 0
  %362 = vmatmul.mubr.bf16.gmra.mrb[0].mxu0 %v175
  %v363 = vpop.f32.mrb[0].mxu0
  %v364 = vadd.f32 %v111, %v363
  %v365 = vpop.f32.mrb[0].mxu0
  %v366 = vpop.f32.mrb[0].mxu0
  %v367 = vadd.f32 %v111, %v366
  %v368 = vpop.f32.mrb[0].mxu0
  %369 = vmatprep.mubr.bf16.mxu0 0
  %370 = vmatmul.mubr.bf16.gmra.mrb[0].mxu0 %v178
  %v371 = vpop.f32.mrb[0].mxu0
  %v372 = vadd.f32 %v111, %v371
  %v373 = vpop.f32.mrb[0].mxu0
  %v374 = vpop.f32.mrb[0].mxu0
  %v375 = vadd.f32 %v111, %v374
  %v376 = vpop.f32.mrb[0].mxu0
  %377 = vmatprep.mubr.bf16.mxu0 0
  %378 = vmatmul.mubr.bf16.gmra.mrb[0].mxu0 %v181
  %v379 = vpop.f32.mrb[0].mxu0
  %v380 = vadd.f32 %v111, %v379
  %v381 = vpop.f32.mrb[0].mxu0
  %v382 = vpop.f32.mrb[0].mxu0
  %v383 = vadd.f32 %v111, %v382
  %v384 = vpop.f32.mrb[0].mxu0
  %385 = vmatprep.mubr.bf16.mxu0 0
  %386 = vmatmul.mubr.bf16.gmra.mrb[0].mxu0 %v184
  %v387 = vpop.f32.mrb[0].mxu0
  %v388 = vadd.f32 %v111, %v387
  %v389 = vpop.f32.mrb[0].mxu0
  %v390 = vpop.f32.mrb[0].mxu0
  %v391 = vadd.f32 %v111, %v390
  %v392 = vpop.f32.mrb[0].mxu0
  %393 = vmatprep.mubr.bf16.mxu0 0
  %394 = vmatmul.mubr.bf16.gmra.mrb[0].mxu0 %v187
  %v395 = vpop.f32.mrb[0].mxu0
  %v396 = vadd.f32 %v111, %v395
  %v397 = vpop.f32.mrb[0].mxu0
  %v398 = vpop.f32.mrb[0].mxu0
  %v399 = vadd.f32 %v111, %v398
  %v400 = vpop.f32.mrb[0].mxu0
  %401 = vmatprep.mubr.bf16.mxu0 0
  %402 = vmatmul.mubr.bf16.gmra.mrb[0].mxu0 %v190
  %v403 = vpop.f32.mrb[0].mxu0
  %v404 = vadd.f32 %v111, %v403
  %v405 = vpop.f32.mrb[0].mxu0
  %v406 = vpop.f32.mrb[0].mxu0
  %v407 = vadd.f32 %v111, %v406
  %v408 = vpop.f32.mrb[0].mxu0
  %409 = vmatprep.mubr.bf16.mxu0 0
  %410 = vmatmul.mubr.bf16.gmra.mrb[0].mxu0 %v193
  %v411 = vpop.f32.mrb[0].mxu0
  %v412 = vadd.f32 %v111, %v411
  %v413 = vpop.f32.mrb[0].mxu0
  %v414 = vpop.f32.mrb[0].mxu0
  %v415 = vadd.f32 %v111, %v414
  %v416 = vpop.f32.mrb[0].mxu0
  %417 = vmatprep.mubr.bf16.mxu0 0
  %418 = vmatmul.mubr.bf16.gmra.mrb[0].mxu0 %v196
  %v419 = vpop.f32.mrb[0].mxu0
  %v420 = vadd.f32 %v111, %v419
  %v421 = vpop.f32.mrb[0].mxu0
  %v422 = vpop.f32.mrb[0].mxu0
  %v423 = vadd.f32 %v111, %v422
  %v424 = vpop.f32.mrb[0].mxu0
  %425 = vmatprep.mubr.bf16.mxu0 0
  %426 = vmatmul.mubr.bf16.gmra.mrb[0].mxu0 %v199
  %v427 = vpop.f32.mrb[0].mxu0
  %v428 = vadd.f32 %v111, %v427
  %v429 = vpop.f32.mrb[0].mxu0
  %v430 = vpop.f32.mrb[0].mxu0
  %v431 = vadd.f32 %v111, %v430
  %v432 = vpop.f32.mrb[0].mxu0
  %433 = vdwg.mxu0
  %v434 = vmax.f32 %v236, 0.0
  %v435 = vmax.f32 %v239, 0.0
  %v436 = vmax.f32 %v244, 0.0
  %v437 = vmax.f32 %v247, 0.0
  %v438 = vmax.f32 %v252, 0.0
  %v439 = vmax.f32 %v255, 0.0
  %v440 = vmax.f32 %v260, 0.0
  %v441 = vmax.f32 %v263, 0.0
  %v442 = vmax.f32 %v268, 0.0
  %v443 = vmax.f32 %v271, 0.0
  %v444 = vmax.f32 %v276, 0.0
  %v445 = vmax.f32 %v279, 0.0
  %v446 = vmax.f32 %v284, 0.0
  %v447 = vmax.f32 %v287, 0.0
  %v448 = vmax.f32 %v292, 0.0
  %v449 = vmax.f32 %v295, 0.0
  %v450 = vmax.f32 %v300, 0.0
  %v451 = vmax.f32 %v303, 0.0
  %v452 = vmax.f32 %v308, 0.0
  %v453 = vmax.f32 %v311, 0.0
  %v454 = vmax.f32 %v316, 0.0
  %v455 = vmax.f32 %v319, 0.0
  %v456 = vmax.f32 %v324, 0.0
  %v457 = vmax.f32 %v327, 0.0
  %v458 = vmax.f32 %v332, 0.0
  %v459 = vmax.f32 %v335, 0.0
  %v460 = vmax.f32 %v340, 0.0
  %v461 = vmax.f32 %v343, 0.0
  %v462 = vmax.f32 %v348, 0.0
  %v463 = vmax.f32 %v351, 0.0
  %v464 = vmax.f32 %v356, 0.0
  %v465 = vmax.f32 %v359, 0.0
  %v466 = vmax.f32 %v364, 0.0
  %v467 = vmax.f32 %v367, 0.0
  %v468 = vmax.f32 %v372, 0.0
  %v469 = vmax.f32 %v375, 0.0
  %v470 = vmax.f32 %v380, 0.0
  %v471 = vmax.f32 %v383, 0.0
  %v472 = vmax.f32 %v388, 0.0
  %v473 = vmax.f32 %v391, 0.0
  %v474 = vmax.f32 %v396, 0.0
  %v475 = vmax.f32 %v399, 0.0
  %v476 = vmax.f32 %v404, 0.0
  %v477 = vmax.f32 %v407, 0.0
  %v478 = vmax.f32 %v412, 0.0
  %v479 = vmax.f32 %v415, 0.0
  %v480 = vmax.f32 %v420, 0.0
  %v481 = vmax.f32 %v423, 0.0
  %v482 = vmax.f32 %v428, 0.0
  %v483 = vmax.f32 %v431, 0.0
  %v484 = vpack.c.bf16 %v435, %v434
  %v485 = vpack.c.bf16 %v437, %v436
  %v486 = vpack.c.bf16 %v439, %v438
  %v487 = vpack.c.bf16 %v441, %v440
  %v488 = vpack.c.bf16 %v443, %v442
  %v489 = vpack.c.bf16 %v445, %v444
  %v490 = vpack.c.bf16 %v447, %v446
  %v491 = vpack.c.bf16 %v449, %v448
  %v492 = vpack.c.bf16 %v451, %v450
  %v493 = vpack.c.bf16 %v453, %v452
  %v494 = vpack.c.bf16 %v455, %v454
  %v495 = vpack.c.bf16 %v457, %v456
  %v496 = vpack.c.bf16 %v459, %v458
  %v497 = vpack.c.bf16 %v461, %v460
  %v498 = vpack.c.bf16 %v463, %v462
  %v499 = vpack.c.bf16 %v465, %v464
  %v500 = vpack.c.bf16 %v467, %v466
  %v501 = vpack.c.bf16 %v469, %v468
  %v502 = vpack.c.bf16 %v471, %v470
  %v503 = vpack.c.bf16 %v473, %v472
  %v504 = vpack.c.bf16 %v475, %v474
  %v505 = vpack.c.bf16 %v477, %v476
  %v506 = vpack.c.bf16 %v479, %v478
  %v507 = vpack.c.bf16 %v481, %v480
  %v508 = vpack.c.bf16 %v483, %v482
  %v509 = vld [vmem:[%s3] sm:$0xf]
  %v510 = vld [vmem:[%s3 + $0x4] sm:$0xf]
  %v511 = vld [vmem:[%s3 + $0x8] sm:$0xf]
  %v512 = vld [vmem:[%s3 + $0xc] sm:$0xf]
  %v513 = vld [vmem:[%s4] sm:$0x1]
  %v515 = vlaneseq
  %v516 = vshrl.u32 %v515, 7
  %v517 = vsub.s32 0, %v516
  %v518 = vrot.slane %v513, %v517
  %v524 = vunpack.c.l.b16 %v509
  %v525 = vunpack.c.l.b16 %v510
  %v526 = vunpack.c.l.b16 %v511
  %v527 = vunpack.c.l.b16 %v512
  %v528 = vpack.c.b16 %v525, %v524
  %v529 = vpack.c.b16 %v527, %v526
  %v533 = vsel %vm125, %v484, 0
  %v536 = vsel %vm125, %v485, 0
  %v539 = vsel %vm125, %v486, 0
  %v542 = vsel %vm125, %v487, 0
  %v545 = vsel %vm125, %v488, 0
  %v548 = vsel %vm125, %v489, 0
  %v551 = vsel %vm125, %v490, 0
  %v554 = vsel %vm125, %v491, 0
  %v557 = vsel %vm125, %v492, 0
  %v560 = vsel %vm125, %v493, 0
  %v563 = vsel %vm125, %v494, 0
  %v566 = vsel %vm125, %v495, 0
  %v569 = vsel %vm125, %v496, 0
  %v572 = vsel %vm125, %v497, 0
  %v575 = vsel %vm125, %v498, 0
  %v578 = vsel %vm125, %v499, 0
  %v581 = vsel %vm125, %v500, 0
  %v584 = vsel %vm125, %v501, 0
  %v587 = vsel %vm125, %v502, 0
  %v590 = vsel %vm125, %v503, 0
  %v593 = vsel %vm125, %v504, 0
  %v596 = vsel %vm125, %v505, 0
  %v599 = vsel %vm125, %v506, 0
  %v602 = vsel %vm125, %v507, 0
  %v605 = vsel %vm125, %v508, 0
  %607 = vmatprep.subr.bf16.mxu0 0
  %608 = vmatpush1.bf16.msra.mxu0 %v528
  %609 = vmatprep.subr.bf16.mxu0 0
  %610 = vmatpush1.bf16.msra.mxu0 %v529
  %611 = vmatprep.subr.bf16.mxu0 0
  %612 = vmatpush1.bf16.msra.mxu0 0
  %613 = vmatprep.subr.bf16.mxu0 0
  %614 = vmatpush1.bf16.msra.mxu0 0
  %615 = vmatprep.subr.bf16.mxu0 0
  %616 = vmatpush1.bf16.msra.mxu0 0
  %617 = vmatprep.subr.bf16.mxu0 0
  %618 = vmatpush1.bf16.msra.mxu0 0
  %619 = vmatprep.subr.bf16.mxu0 0
  %620 = vmatpush1.bf16.msra.mxu0 0
  %621 = vmatprep.subr.bf16.mxu0 0
  %622 = vmatpush1.bf16.msra.mxu0 0
  %623 = vmatprep.subr.bf16.mxu0 0
  %624 = vmatpush1.bf16.msra.mxu0 0
  %625 = vmatprep.subr.bf16.mxu0 0
  %626 = vmatpush1.bf16.msra.mxu0 0
  %627 = vmatprep.subr.bf16.mxu0 0
  %628 = vmatpush1.bf16.msra.mxu0 0
  %629 = vmatprep.subr.bf16.mxu0 0
  %630 = vmatpush1.bf16.msra.mxu0 0
  %631 = vmatprep.subr.bf16.mxu0 0
  %632 = vmatpush1.bf16.msra.mxu0 0
  %633 = vmatprep.subr.bf16.mxu0 0
  %634 = vmatpush1.bf16.msra.mxu0 0
  %635 = vmatprep.subr.bf16.mxu0 0
  %636 = vmatpush1.bf16.msra.mxu0 0
  %637 = vmatprep.subr.bf16.mxu0 0
  %638 = vmatpush1.bf16.msra.mxu0 0
  %639 = vmatprep.mubr.bf16.mxu0 0
  %640 = vmatmul.mubr.bf16.gmra.mrb[0].mxu0 %v533
  %v641 = vpop.f32.mrb[0].mxu0
  %v642 = vadd.f32 %v518, %v641
  %v643 = vpop.f32.mrb[0].mxu0
  %v644 = vpop.f32.mrb[0].mxu0
  %v645 = vadd.f32 %v518, %v644
  %v646 = vpop.f32.mrb[0].mxu0
  %647 = vmatprep.mubr.bf16.mxu0 0
  %648 = vmatmul.mubr.bf16.gmra.mrb[0].mxu0 %v536
  %v649 = vpop.f32.mrb[0].mxu0
  %v650 = vadd.f32 %v518, %v649
  %v651 = vpop.f32.mrb[0].mxu0
  %v652 = vpop.f32.mrb[0].mxu0
  %v653 = vadd.f32 %v518, %v652
  %v654 = vpop.f32.mrb[0].mxu0
  %655 = vmatprep.mubr.bf16.mxu0 0
  %656 = vmatmul.mubr.bf16.gmra.mrb[0].mxu0 %v539
  %v657 = vpop.f32.mrb[0].mxu0
  %v658 = vadd.f32 %v518, %v657
  %v659 = vpop.f32.mrb[0].mxu0
  %v660 = vpop.f32.mrb[0].mxu0
  %v661 = vadd.f32 %v518, %v660
  %v662 = vpop.f32.mrb[0].mxu0
  %663 = vmatprep.mubr.bf16.mxu0 0
  %664 = vmatmul.mubr.bf16.gmra.mrb[0].mxu0 %v542
  %v665 = vpop.f32.mrb[0].mxu0
  %v666 = vadd.f32 %v518, %v665
  %v667 = vpop.f32.mrb[0].mxu0
  %v668 = vpop.f32.mrb[0].mxu0
  %v669 = vadd.f32 %v518, %v668
  %v670 = vpop.f32.mrb[0].mxu0
  %671 = vmatprep.mubr.bf16.mxu0 0
  %672 = vmatmul.mubr.bf16.gmra.mrb[0].mxu0 %v545
  %v673 = vpop.f32.mrb[0].mxu0
  %v674 = vadd.f32 %v518, %v673
  %v675 = vpop.f32.mrb[0].mxu0
  %v676 = vpop.f32.mrb[0].mxu0
  %v677 = vadd.f32 %v518, %v676
  %v678 = vpop.f32.mrb[0].mxu0
  %679 = vmatprep.mubr.bf16.mxu0 0
  %680 = vmatmul.mubr.bf16.gmra.mrb[0].mxu0 %v548
  %v681 = vpop.f32.mrb[0].mxu0
  %v682 = vadd.f32 %v518, %v681
  %v683 = vpop.f32.mrb[0].mxu0
  %v684 = vpop.f32.mrb[0].mxu0
  %v685 = vadd.f32 %v518, %v684
  %v686 = vpop.f32.mrb[0].mxu0
  %687 = vmatprep.mubr.bf16.mxu0 0
  %688 = vmatmul.mubr.bf16.gmra.mrb[0].mxu0 %v551
  %v689 = vpop.f32.mrb[0].mxu0
  %v690 = vadd.f32 %v518, %v689
  %v691 = vpop.f32.mrb[0].mxu0
  %v692 = vpop.f32.mrb[0].mxu0
  %v693 = vadd.f32 %v518, %v692
  %v694 = vpop.f32.mrb[0].mxu0
  %695 = vmatprep.mubr.bf16.mxu0 0
  %696 = vmatmul.mubr.bf16.gmra.mrb[0].mxu0 %v554
  %v697 = vpop.f32.mrb[0].mxu0
  %v698 = vadd.f32 %v518, %v697
  %v699 = vpop.f32.mrb[0].mxu0
  %v700 = vpop.f32.mrb[0].mxu0
  %v701 = vadd.f32 %v518, %v700
  %v702 = vpop.f32.mrb[0].mxu0
  %703 = vmatprep.mubr.bf16.mxu0 0
  %704 = vmatmul.mubr.bf16.gmra.mrb[0].mxu0 %v557
  %v705 = vpop.f32.mrb[0].mxu0
  %v706 = vadd.f32 %v518, %v705
  %v707 = vpop.f32.mrb[0].mxu0
  %v708 = vpop.f32.mrb[0].mxu0
  %v709 = vadd.f32 %v518, %v708
  %v710 = vpop.f32.mrb[0].mxu0
  %711 = vmatprep.mubr.bf16.mxu0 0
  %712 = vmatmul.mubr.bf16.gmra.mrb[0].mxu0 %v560
  %v713 = vpop.f32.mrb[0].mxu0
  %v714 = vadd.f32 %v518, %v713
  %v715 = vpop.f32.mrb[0].mxu0
  %v716 = vpop.f32.mrb[0].mxu0
  %v717 = vadd.f32 %v518, %v716
  %v718 = vpop.f32.mrb[0].mxu0
  %719 = vmatprep.mubr.bf16.mxu0 0
  %720 = vmatmul.mubr.bf16.gmra.mrb[0].mxu0 %v563
  %v721 = vpop.f32.mrb[0].mxu0
  %v722 = vadd.f32 %v518, %v721
  %v723 = vpop.f32.mrb[0].mxu0
  %v724 = vpop.f32.mrb[0].mxu0
  %v725 = vadd.f32 %v518, %v724
  %v726 = vpop.f32.mrb[0].mxu0
  %727 = vmatprep.mubr.bf16.mxu0 0
  %728 = vmatmul.mubr.bf16.gmra.mrb[0].mxu0 %v566
  %v729 = vpop.f32.mrb[0].mxu0
  %v730 = vadd.f32 %v518, %v729
  %v731 = vpop.f32.mrb[0].mxu0
  %v732 = vpop.f32.mrb[0].mxu0
  %v733 = vadd.f32 %v518, %v732
  %v734 = vpop.f32.mrb[0].mxu0
  %735 = vmatprep.mubr.bf16.mxu0 0
  %736 = vmatmul.mubr.bf16.gmra.mrb[0].mxu0 %v569
  %v737 = vpop.f32.mrb[0].mxu0
  %v738 = vadd.f32 %v518, %v737
  %v739 = vpop.f32.mrb[0].mxu0
  %v740 = vpop.f32.mrb[0].mxu0
  %v741 = vadd.f32 %v518, %v740
  %v742 = vpop.f32.mrb[0].mxu0
  %743 = vmatprep.mubr.bf16.mxu0 0
  %744 = vmatmul.mubr.bf16.gmra.mrb[0].mxu0 %v572
  %v745 = vpop.f32.mrb[0].mxu0
  %v746 = vadd.f32 %v518, %v745
  %v747 = vpop.f32.mrb[0].mxu0
  %v748 = vpop.f32.mrb[0].mxu0
  %v749 = vadd.f32 %v518, %v748
  %v750 = vpop.f32.mrb[0].mxu0
  %751 = vmatprep.mubr.bf16.mxu0 0
  %752 = vmatmul.mubr.bf16.gmra.mrb[0].mxu0 %v575
  %v753 = vpop.f32.mrb[0].mxu0
  %v754 = vadd.f32 %v518, %v753
  %v755 = vpop.f32.mrb[0].mxu0
  %v756 = vpop.f32.mrb[0].mxu0
  %v757 = vadd.f32 %v518, %v756
  %v758 = vpop.f32.mrb[0].mxu0
  %759 = vmatprep.mubr.bf16.mxu0 0
  %760 = vmatmul.mubr.bf16.gmra.mrb[0].mxu0 %v578
  %v761 = vpop.f32.mrb[0].mxu0
  %v762 = vadd.f32 %v518, %v761
  %v763 = vpop.f32.mrb[0].mxu0
  %v764 = vpop.f32.mrb[0].mxu0
  %v765 = vadd.f32 %v518, %v764
  %v766 = vpop.f32.mrb[0].mxu0
  %767 = vmatprep.mubr.bf16.mxu0 0
  %768 = vmatmul.mubr.bf16.gmra.mrb[0].mxu0 %v581
  %v769 = vpop.f32.mrb[0].mxu0
  %v770 = vadd.f32 %v518, %v769
  %v771 = vpop.f32.mrb[0].mxu0
  %v772 = vpop.f32.mrb[0].mxu0
  %v773 = vadd.f32 %v518, %v772
  %v774 = vpop.f32.mrb[0].mxu0
  %775 = vmatprep.mubr.bf16.mxu0 0
  %776 = vmatmul.mubr.bf16.gmra.mrb[0].mxu0 %v584
  %v777 = vpop.f32.mrb[0].mxu0
  %v778 = vadd.f32 %v518, %v777
  %v779 = vpop.f32.mrb[0].mxu0
  %v780 = vpop.f32.mrb[0].mxu0
  %v781 = vadd.f32 %v518, %v780
  %v782 = vpop.f32.mrb[0].mxu0
  %783 = vmatprep.mubr.bf16.mxu0 0
  %784 = vmatmul.mubr.bf16.gmra.mrb[0].mxu0 %v587
  %v785 = vpop.f32.mrb[0].mxu0
  %v786 = vadd.f32 %v518, %v785
  %v787 = vpop.f32.mrb[0].mxu0
  %v788 = vpop.f32.mrb[0].mxu0
  %v789 = vadd.f32 %v518, %v788
  %v790 = vpop.f32.mrb[0].mxu0
  %791 = vmatprep.mubr.bf16.mxu0 0
  %792 = vmatmul.mubr.bf16.gmra.mrb[0].mxu0 %v590
  %v793 = vpop.f32.mrb[0].mxu0
  %v794 = vadd.f32 %v518, %v793
  %v795 = vpop.f32.mrb[0].mxu0
  %v796 = vpop.f32.mrb[0].mxu0
  %v797 = vadd.f32 %v518, %v796
  %v798 = vpop.f32.mrb[0].mxu0
  %799 = vmatprep.mubr.bf16.mxu0 0
  %800 = vmatmul.mubr.bf16.gmra.mrb[0].mxu0 %v593
  %v801 = vpop.f32.mrb[0].mxu0
  %v802 = vadd.f32 %v518, %v801
  %v803 = vpop.f32.mrb[0].mxu0
  %v804 = vpop.f32.mrb[0].mxu0
  %v805 = vadd.f32 %v518, %v804
  %v806 = vpop.f32.mrb[0].mxu0
  %807 = vmatprep.mubr.bf16.mxu0 0
  %808 = vmatmul.mubr.bf16.gmra.mrb[0].mxu0 %v596
  %v809 = vpop.f32.mrb[0].mxu0
  %v810 = vadd.f32 %v518, %v809
  %v811 = vpop.f32.mrb[0].mxu0
  %v812 = vpop.f32.mrb[0].mxu0
  %v813 = vadd.f32 %v518, %v812
  %v814 = vpop.f32.mrb[0].mxu0
  %815 = vmatprep.mubr.bf16.mxu0 0
  %816 = vmatmul.mubr.bf16.gmra.mrb[0].mxu0 %v599
  %v817 = vpop.f32.mrb[0].mxu0
  %v818 = vadd.f32 %v518, %v817
  %v819 = vpop.f32.mrb[0].mxu0
  %v820 = vpop.f32.mrb[0].mxu0
  %v821 = vadd.f32 %v518, %v820
  %v822 = vpop.f32.mrb[0].mxu0
  %823 = vmatprep.mubr.bf16.mxu0 0
  %824 = vmatmul.mubr.bf16.gmra.mrb[0].mxu0 %v602
  %v825 = vpop.f32.mrb[0].mxu0
  %v826 = vadd.f32 %v518, %v825
  %v827 = vpop.f32.mrb[0].mxu0
  %v828 = vpop.f32.mrb[0].mxu0
  %v829 = vadd.f32 %v518, %v828
  %v830 = vpop.f32.mrb[0].mxu0
  %831 = vmatprep.mubr.bf16.mxu0 0
  %832 = vmatmul.mubr.bf16.gmra.mrb[0].mxu0 %v605
  %v833 = vpop.f32.mrb[0].mxu0
  %v834 = vadd.f32 %v518, %v833
  %v835 = vpop.f32.mrb[0].mxu0
  %v836 = vpop.f32.mrb[0].mxu0
  %v837 = vadd.f32 %v518, %v836
  %v838 = vpop.f32.mrb[0].mxu0
  %839 = vdwg.mxu0
  %v840 = vmax.f32 %v642, 0.0
  %v841 = vmax.f32 %v645, 0.0
  %v842 = vmax.f32 %v650, 0.0
  %v843 = vmax.f32 %v653, 0.0
  %v844 = vmax.f32 %v658, 0.0
  %v845 = vmax.f32 %v661, 0.0
  %v846 = vmax.f32 %v666, 0.0
  %v847 = vmax.f32 %v669, 0.0
  %v848 = vmax.f32 %v674, 0.0
  %v849 = vmax.f32 %v677, 0.0
  %v850 = vmax.f32 %v682, 0.0
  %v851 = vmax.f32 %v685, 0.0
  %v852 = vmax.f32 %v690, 0.0
  %v853 = vmax.f32 %v693, 0.0
  %v854 = vmax.f32 %v698, 0.0
  %v855 = vmax.f32 %v701, 0.0
  %v856 = vmax.f32 %v706, 0.0
  %v857 = vmax.f32 %v709, 0.0
  %v858 = vmax.f32 %v714, 0.0
  %v859 = vmax.f32 %v717, 0.0
  %v860 = vmax.f32 %v722, 0.0
  %v861 = vmax.f32 %v725, 0.0
  %v862 = vmax.f32 %v730, 0.0
  %v863 = vmax.f32 %v733, 0.0
  %v864 = vmax.f32 %v738, 0.0
  %v865 = vmax.f32 %v741, 0.0
  %v866 = vmax.f32 %v746, 0.0
  %v867 = vmax.f32 %v749, 0.0
  %v868 = vmax.f32 %v754, 0.0
  %v869 = vmax.f32 %v757, 0.0
  %v870 = vmax.f32 %v762, 0.0
  %v871 = vmax.f32 %v765, 0.0
  %v872 = vmax.f32 %v770, 0.0
  %v873 = vmax.f32 %v773, 0.0
  %v874 = vmax.f32 %v778, 0.0
  %v875 = vmax.f32 %v781, 0.0
  %v876 = vmax.f32 %v786, 0.0
  %v877 = vmax.f32 %v789, 0.0
  %v878 = vmax.f32 %v794, 0.0
  %v879 = vmax.f32 %v797, 0.0
  %v880 = vmax.f32 %v802, 0.0
  %v881 = vmax.f32 %v805, 0.0
  %v882 = vmax.f32 %v810, 0.0
  %v883 = vmax.f32 %v813, 0.0
  %v884 = vmax.f32 %v818, 0.0
  %v885 = vmax.f32 %v821, 0.0
  %v886 = vmax.f32 %v826, 0.0
  %v887 = vmax.f32 %v829, 0.0
  %v888 = vmax.f32 %v834, 0.0
  %v889 = vmax.f32 %v837, 0.0
  %v890 = vpack.c.bf16 %v841, %v840
  %v891 = vpack.c.bf16 %v843, %v842
  %v892 = vpack.c.bf16 %v845, %v844
  %v893 = vpack.c.bf16 %v847, %v846
  %v894 = vpack.c.bf16 %v849, %v848
  %v895 = vpack.c.bf16 %v851, %v850
  %v896 = vpack.c.bf16 %v853, %v852
  %v897 = vpack.c.bf16 %v855, %v854
  %v898 = vpack.c.bf16 %v857, %v856
  %v899 = vpack.c.bf16 %v859, %v858
  %v900 = vpack.c.bf16 %v861, %v860
  %v901 = vpack.c.bf16 %v863, %v862
  %v902 = vpack.c.bf16 %v865, %v864
  %v903 = vpack.c.bf16 %v867, %v866
  %v904 = vpack.c.bf16 %v869, %v868
  %v905 = vpack.c.bf16 %v871, %v870
  %v906 = vpack.c.bf16 %v873, %v872
  %v907 = vpack.c.bf16 %v875, %v874
  %v908 = vpack.c.bf16 %v877, %v876
  %v909 = vpack.c.bf16 %v879, %v878
  %v910 = vpack.c.bf16 %v881, %v880
  %v911 = vpack.c.bf16 %v883, %v882
  %v912 = vpack.c.bf16 %v885, %v884
  %v913 = vpack.c.bf16 %v887, %v886
  %v914 = vpack.c.bf16 %v889, %v888
  %v915 = vld [vmem:[%s5] sm:$0xff]
  %v916 = vld [vmem:[%s5 + $0x8] sm:$0xff]
  %v917 = vld [vmem:[%s5 + $0x10] sm:$0xff]
  %v918 = vld [vmem:[%s5 + $0x18] sm:$0xff]
  %v919 = vld [vmem:[%s6] sm:$0x3]
  %v921 = vlaneseq
  %v922 = vshrl.u32 %v921, 7
  %v923 = vsub.s32 0, %v922
  %v924 = vrot.slane %v919, %v923
  %v925 = vlaneseq
  %v926 = vshrl.u32 %v925, 7
  %v927 = vsub.s32 1, %v926
  %v928 = vrot.slane %v919, %v927
  %v935 = vunpack.c.l.b16 %v915
  %v936 = vunpack.c.h.b16 %v915
  %v937 = vunpack.c.l.b16 %v916
  %v938 = vunpack.c.h.b16 %v916
  %v939 = vunpack.c.l.b16 %v917
  %v940 = vunpack.c.h.b16 %v917
  %v941 = vunpack.c.l.b16 %v918
  %v942 = vunpack.c.h.b16 %v918
  %v943 = vpack.c.b16 %v937, %v935
  %v944 = vpack.c.b16 %v938, %v936
  %v945 = vpack.c.b16 %v941, %v939
  %v946 = vpack.c.b16 %v942, %v940
  %v952 = vsel %vm125, %v890, 0
  %v955 = vsel %vm125, %v891, 0
  %v958 = vsel %vm125, %v892, 0
  %v961 = vsel %vm125, %v893, 0
  %v964 = vsel %vm125, %v894, 0
  %v967 = vsel %vm125, %v895, 0
  %v970 = vsel %vm125, %v896, 0
  %v973 = vsel %vm125, %v897, 0
  %v976 = vsel %vm125, %v898, 0
  %v979 = vsel %vm125, %v899, 0
  %v982 = vsel %vm125, %v900, 0
  %v985 = vsel %vm125, %v901, 0
  %v988 = vsel %vm125, %v902, 0
  %v991 = vsel %vm125, %v903, 0
  %v994 = vsel %vm125, %v904, 0
  %v997 = vsel %vm125, %v905, 0
  %v1000 = vsel %vm125, %v906, 0
  %v1003 = vsel %vm125, %v907, 0
  %v1006 = vsel %vm125, %v908, 0
  %v1009 = vsel %vm125, %v909, 0
  %v1012 = vsel %vm125, %v910, 0
  %v1015 = vsel %vm125, %v911, 0
  %v1018 = vsel %vm125, %v912, 0
  %v1021 = vsel %vm125, %v913, 0
  %v1024 = vsel %vm125, %v914, 0
  %1026 = vmatprep.subr.bf16.mxu0 %v944
  %1027 = vmatpush1.bf16.msra.mxu0 %v943
  %1028 = vmatprep.subr.bf16.mxu0 %v946
  %1029 = vmatpush1.bf16.msra.mxu0 %v945
  %1030 = vmatprep.subr.bf16.mxu0 0
  %1031 = vmatpush1.bf16.msra.mxu0 0
  %1032 = vmatprep.subr.bf16.mxu0 0
  %1033 = vmatpush1.bf16.msra.mxu0 0
  %1034 = vmatprep.subr.bf16.mxu0 0
  %1035 = vmatpush1.bf16.msra.mxu0 0
  %1036 = vmatprep.subr.bf16.mxu0 0
  %1037 = vmatpush1.bf16.msra.mxu0 0
  %1038 = vmatprep.subr.bf16.mxu0 0
  %1039 = vmatpush1.bf16.msra.mxu0 0
  %1040 = vmatprep.subr.bf16.mxu0 0
  %1041 = vmatpush1.bf16.msra.mxu0 0
  %1042 = vmatprep.subr.bf16.mxu0 0
  %1043 = vmatpush1.bf16.msra.mxu0 0
  %1044 = vmatprep.subr.bf16.mxu0 0
  %1045 = vmatpush1.bf16.msra.mxu0 0
  %1046 = vmatprep.subr.bf16.mxu0 0
  %1047 = vmatpush1.bf16.msra.mxu0 0
  %1048 = vmatprep.subr.bf16.mxu0 0
  %1049 = vmatpush1.bf16.msra.mxu0 0
  %1050 = vmatprep.subr.bf16.mxu0 0
  %1051 = vmatpush1.bf16.msra.mxu0 0
  %1052 = vmatprep.subr.bf16.mxu0 0
  %1053 = vmatpush1.bf16.msra.mxu0 0
  %1054 = vmatprep.subr.bf16.mxu0 0
  %1055 = vmatpush1.bf16.msra.mxu0 0
  %1056 = vmatprep.subr.bf16.mxu0 0
  %1057 = vmatpush1.bf16.msra.mxu0 0
  %1058 = vmatprep.mubr.bf16.mxu0 0
  %1059 = vmatmul.mubr.bf16.gmra.mrb[0].mxu0 %v952
  %v1060 = vpop.f32.mrb[0].mxu0
  %v1061 = vadd.f32 %v924, %v1060
  %v1062 = vpop.f32.mrb[0].mxu0
  %v1063 = vadd.f32 %v928, %v1062
  %v1064 = vpop.f32.mrb[0].mxu0
  %v1065 = vadd.f32 %v924, %v1064
  %v1066 = vpop.f32.mrb[0].mxu0
  %v1067 = vadd.f32 %v928, %v1066
  %1068 = vmatprep.mubr.bf16.mxu0 0
  %1069 = vmatmul.mubr.bf16.gmra.mrb[0].mxu0 %v955
  %v1070 = vpop.f32.mrb[0].mxu0
  %v1071 = vadd.f32 %v924, %v1070
  %v1072 = vpop.f32.mrb[0].mxu0
  %v1073 = vadd.f32 %v928, %v1072
  %v1074 = vpop.f32.mrb[0].mxu0
  %v1075 = vadd.f32 %v924, %v1074
  %v1076 = vpop.f32.mrb[0].mxu0
  %v1077 = vadd.f32 %v928, %v1076
  %1078 = vmatprep.mubr.bf16.mxu0 0
  %1079 = vmatmul.mubr.bf16.gmra.mrb[0].mxu0 %v958
  %v1080 = vpop.f32.mrb[0].mxu0
  %v1081 = vadd.f32 %v924, %v1080
  %v1082 = vpop.f32.mrb[0].mxu0
  %v1083 = vadd.f32 %v928, %v1082
  %v1084 = vpop.f32.mrb[0].mxu0
  %v1085 = vadd.f32 %v924, %v1084
  %v1086 = vpop.f32.mrb[0].mxu0
  %v1087 = vadd.f32 %v928, %v1086
  %1088 = vmatprep.mubr.bf16.mxu0 0
  %1089 = vmatmul.mubr.bf16.gmra.mrb[0].mxu0 %v961
  %v1090 = vpop.f32.mrb[0].mxu0
  %v1091 = vadd.f32 %v924, %v1090
  %v1092 = vpop.f32.mrb[0].mxu0
  %v1093 = vadd.f32 %v928, %v1092
  %v1094 = vpop.f32.mrb[0].mxu0
  %v1095 = vadd.f32 %v924, %v1094
  %v1096 = vpop.f32.mrb[0].mxu0
  %v1097 = vadd.f32 %v928, %v1096
  %1098 = vmatprep.mubr.bf16.mxu0 0
  %1099 = vmatmul.mubr.bf16.gmra.mrb[0].mxu0 %v964
  %v1100 = vpop.f32.mrb[0].mxu0
  %v1101 = vadd.f32 %v924, %v1100
  %v1102 = vpop.f32.mrb[0].mxu0
  %v1103 = vadd.f32 %v928, %v1102
  %v1104 = vpop.f32.mrb[0].mxu0
  %v1105 = vadd.f32 %v924, %v1104
  %v1106 = vpop.f32.mrb[0].mxu0
  %v1107 = vadd.f32 %v928, %v1106
  %1108 = vmatprep.mubr.bf16.mxu0 0
  %1109 = vmatmul.mubr.bf16.gmra.mrb[0].mxu0 %v967
  %v1110 = vpop.f32.mrb[0].mxu0
  %v1111 = vadd.f32 %v924, %v1110
  %v1112 = vpop.f32.mrb[0].mxu0
  %v1113 = vadd.f32 %v928, %v1112
  %v1114 = vpop.f32.mrb[0].mxu0
  %v1115 = vadd.f32 %v924, %v1114
  %v1116 = vpop.f32.mrb[0].mxu0
  %v1117 = vadd.f32 %v928, %v1116
  %1118 = vmatprep.mubr.bf16.mxu0 0
  %1119 = vmatmul.mubr.bf16.gmra.mrb[0].mxu0 %v970
  %v1120 = vpop.f32.mrb[0].mxu0
  %v1121 = vadd.f32 %v924, %v1120
  %v1122 = vpop.f32.mrb[0].mxu0
  %v1123 = vadd.f32 %v928, %v1122
  %v1124 = vpop.f32.mrb[0].mxu0
  %v1125 = vadd.f32 %v924, %v1124
  %v1126 = vpop.f32.mrb[0].mxu0
  %v1127 = vadd.f32 %v928, %v1126
  %1128 = vmatprep.mubr.bf16.mxu0 0
  %1129 = vmatmul.mubr.bf16.gmra.mrb[0].mxu0 %v973
  %v1130 = vpop.f32.mrb[0].mxu0
  %v1131 = vadd.f32 %v924, %v1130
  %v1132 = vpop.f32.mrb[0].mxu0
  %v1133 = vadd.f32 %v928, %v1132
  %v1134 = vpop.f32.mrb[0].mxu0
  %v1135 = vadd.f32 %v924, %v1134
  %v1136 = vpop.f32.mrb[0].mxu0
  %v1137 = vadd.f32 %v928, %v1136
  %1138 = vmatprep.mubr.bf16.mxu0 0
  %1139 = vmatmul.mubr.bf16.gmra.mrb[0].mxu0 %v976
  %v1140 = vpop.f32.mrb[0].mxu0
  %v1141 = vadd.f32 %v924, %v1140
  %v1142 = vpop.f32.mrb[0].mxu0
  %v1143 = vadd.f32 %v928, %v1142
  %v1144 = vpop.f32.mrb[0].mxu0
  %v1145 = vadd.f32 %v924, %v1144
  %v1146 = vpop.f32.mrb[0].mxu0
  %v1147 = vadd.f32 %v928, %v1146
  %1148 = vmatprep.mubr.bf16.mxu0 0
  %1149 = vmatmul.mubr.bf16.gmra.mrb[0].mxu0 %v979
  %v1150 = vpop.f32.mrb[0].mxu0
  %v1151 = vadd.f32 %v924, %v1150
  %v1152 = vpop.f32.mrb[0].mxu0
  %v1153 = vadd.f32 %v928, %v1152
  %v1154 = vpop.f32.mrb[0].mxu0
  %v1155 = vadd.f32 %v924, %v1154
  %v1156 = vpop.f32.mrb[0].mxu0
  %v1157 = vadd.f32 %v928, %v1156
  %1158 = vmatprep.mubr.bf16.mxu0 0
  %1159 = vmatmul.mubr.bf16.gmra.mrb[0].mxu0 %v982
  %v1160 = vpop.f32.mrb[0].mxu0
  %v1161 = vadd.f32 %v924, %v1160
  %v1162 = vpop.f32.mrb[0].mxu0
  %v1163 = vadd.f32 %v928, %v1162
  %v1164 = vpop.f32.mrb[0].mxu0
  %v1165 = vadd.f32 %v924, %v1164
  %v1166 = vpop.f32.mrb[0].mxu0
  %v1167 = vadd.f32 %v928, %v1166
  %1168 = vmatprep.mubr.bf16.mxu0 0
  %1169 = vmatmul.mubr.bf16.gmra.mrb[0].mxu0 %v985
  %v1170 = vpop.f32.mrb[0].mxu0
  %v1171 = vadd.f32 %v924, %v1170
  %v1172 = vpop.f32.mrb[0].mxu0
  %v1173 = vadd.f32 %v928, %v1172
  %v1174 = vpop.f32.mrb[0].mxu0
  %v1175 = vadd.f32 %v924, %v1174
  %v1176 = vpop.f32.mrb[0].mxu0
  %v1177 = vadd.f32 %v928, %v1176
  %1178 = vmatprep.mubr.bf16.mxu0 0
  %1179 = vmatmul.mubr.bf16.gmra.mrb[0].mxu0 %v988
  %v1180 = vpop.f32.mrb[0].mxu0
  %v1181 = vadd.f32 %v924, %v1180
  %v1182 = vpop.f32.mrb[0].mxu0
  %v1183 = vadd.f32 %v928, %v1182
  %v1184 = vpop.f32.mrb[0].mxu0
  %v1185 = vadd.f32 %v924, %v1184
  %v1186 = vpop.f32.mrb[0].mxu0
  %v1187 = vadd.f32 %v928, %v1186
  %1188 = vmatprep.mubr.bf16.mxu0 0
  %1189 = vmatmul.mubr.bf16.gmra.mrb[0].mxu0 %v991
  %v1190 = vpop.f32.mrb[0].mxu0
  %v1191 = vadd.f32 %v924, %v1190
  %v1192 = vpop.f32.mrb[0].mxu0
  %v1193 = vadd.f32 %v928, %v1192
  %v1194 = vpop.f32.mrb[0].mxu0
  %v1195 = vadd.f32 %v924, %v1194
  %v1196 = vpop.f32.mrb[0].mxu0
  %v1197 = vadd.f32 %v928, %v1196
  %1198 = vmatprep.mubr.bf16.mxu0 0
  %1199 = vmatmul.mubr.bf16.gmra.mrb[0].mxu0 %v994
  %v1200 = vpop.f32.mrb[0].mxu0
  %v1201 = vadd.f32 %v924, %v1200
  %v1202 = vpop.f32.mrb[0].mxu0
  %v1203 = vadd.f32 %v928, %v1202
  %v1204 = vpop.f32.mrb[0].mxu0
  %v1205 = vadd.f32 %v924, %v1204
  %v1206 = vpop.f32.mrb[0].mxu0
  %v1207 = vadd.f32 %v928, %v1206
  %1208 = vmatprep.mubr.bf16.mxu0 0
  %1209 = vmatmul.mubr.bf16.gmra.mrb[0].mxu0 %v997
  %v1210 = vpop.f32.mrb[0].mxu0
  %v1211 = vadd.f32 %v924, %v1210
  %v1212 = vpop.f32.mrb[0].mxu0
  %v1213 = vadd.f32 %v928, %v1212
  %v1214 = vpop.f32.mrb[0].mxu0
  %v1215 = vadd.f32 %v924, %v1214
  %v1216 = vpop.f32.mrb[0].mxu0
  %v1217 = vadd.f32 %v928, %v1216
  %1218 = vmatprep.mubr.bf16.mxu0 0
  %1219 = vmatmul.mubr.bf16.gmra.mrb[0].mxu0 %v1000
  %v1220 = vpop.f32.mrb[0].mxu0
  %v1221 = vadd.f32 %v924, %v1220
  %v1222 = vpop.f32.mrb[0].mxu0
  %v1223 = vadd.f32 %v928, %v1222
  %v1224 = vpop.f32.mrb[0].mxu0
  %v1225 = vadd.f32 %v924, %v1224
  %v1226 = vpop.f32.mrb[0].mxu0
  %v1227 = vadd.f32 %v928, %v1226
  %1228 = vmatprep.mubr.bf16.mxu0 0
  %1229 = vmatmul.mubr.bf16.gmra.mrb[0].mxu0 %v1003
  %v1230 = vpop.f32.mrb[0].mxu0
  %v1231 = vadd.f32 %v924, %v1230
  %v1232 = vpop.f32.mrb[0].mxu0
  %v1233 = vadd.f32 %v928, %v1232
  %v1234 = vpop.f32.mrb[0].mxu0
  %v1235 = vadd.f32 %v924, %v1234
  %v1236 = vpop.f32.mrb[0].mxu0
  %v1237 = vadd.f32 %v928, %v1236
  %1238 = vmatprep.mubr.bf16.mxu0 0
  %1239 = vmatmul.mubr.bf16.gmra.mrb[0].mxu0 %v1006
  %v1240 = vpop.f32.mrb[0].mxu0
  %v1241 = vadd.f32 %v924, %v1240
  %v1242 = vpop.f32.mrb[0].mxu0
  %v1243 = vadd.f32 %v928, %v1242
  %v1244 = vpop.f32.mrb[0].mxu0
  %v1245 = vadd.f32 %v924, %v1244
  %v1246 = vpop.f32.mrb[0].mxu0
  %v1247 = vadd.f32 %v928, %v1246
  %1248 = vmatprep.mubr.bf16.mxu0 0
  %1249 = vmatmul.mubr.bf16.gmra.mrb[0].mxu0 %v1009
  %v1250 = vpop.f32.mrb[0].mxu0
  %v1251 = vadd.f32 %v924, %v1250
  %v1252 = vpop.f32.mrb[0].mxu0
  %v1253 = vadd.f32 %v928, %v1252
  %v1254 = vpop.f32.mrb[0].mxu0
  %v1255 = vadd.f32 %v924, %v1254
  %v1256 = vpop.f32.mrb[0].mxu0
  %v1257 = vadd.f32 %v928, %v1256
  %1258 = vmatprep.mubr.bf16.mxu0 0
  %1259 = vmatmul.mubr.bf16.gmra.mrb[0].mxu0 %v1012
  %v1260 = vpop.f32.mrb[0].mxu0
  %v1261 = vadd.f32 %v924, %v1260
  %v1262 = vpop.f32.mrb[0].mxu0
  %v1263 = vadd.f32 %v928, %v1262
  %v1264 = vpop.f32.mrb[0].mxu0
  %v1265 = vadd.f32 %v924, %v1264
  %v1266 = vpop.f32.mrb[0].mxu0
  %v1267 = vadd.f32 %v928, %v1266
  %1268 = vmatprep.mubr.bf16.mxu0 0
  %1269 = vmatmul.mubr.bf16.gmra.mrb[0].mxu0 %v1015
  %v1270 = vpop.f32.mrb[0].mxu0
  %v1271 = vadd.f32 %v924, %v1270
  %v1272 = vpop.f32.mrb[0].mxu0
  %v1273 = vadd.f32 %v928, %v1272
  %v1274 = vpop.f32.mrb[0].mxu0
  %v1275 = vadd.f32 %v924, %v1274
  %v1276 = vpop.f32.mrb[0].mxu0
  %v1277 = vadd.f32 %v928, %v1276
  %1278 = vmatprep.mubr.bf16.mxu0 0
  %1279 = vmatmul.mubr.bf16.gmra.mrb[0].mxu0 %v1018
  %v1280 = vpop.f32.mrb[0].mxu0
  %v1281 = vadd.f32 %v924, %v1280
  %v1282 = vpop.f32.mrb[0].mxu0
  %v1283 = vadd.f32 %v928, %v1282
  %v1284 = vpop.f32.mrb[0].mxu0
  %v1285 = vadd.f32 %v924, %v1284
  %v1286 = vpop.f32.mrb[0].mxu0
  %v1287 = vadd.f32 %v928, %v1286
  %1288 = vmatprep.mubr.bf16.mxu0 0
  %1289 = vmatmul.mubr.bf16.gmra.mrb[0].mxu0 %v1021
  %v1290 = vpop.f32.mrb[0].mxu0
  %v1291 = vadd.f32 %v924, %v1290
  %v1292 = vpop.f32.mrb[0].mxu0
  %v1293 = vadd.f32 %v928, %v1292
  %v1294 = vpop.f32.mrb[0].mxu0
  %v1295 = vadd.f32 %v924, %v1294
  %v1296 = vpop.f32.mrb[0].mxu0
  %v1297 = vadd.f32 %v928, %v1296
  %1298 = vmatprep.mubr.bf16.mxu0 0
  %1299 = vmatmul.mubr.bf16.gmra.mrb[0].mxu0 %v1024
  %v1300 = vpop.f32.mrb[0].mxu0
  %v1301 = vadd.f32 %v924, %v1300
  %v1302 = vpop.f32.mrb[0].mxu0
  %v1303 = vadd.f32 %v928, %v1302
  %v1304 = vpop.f32.mrb[0].mxu0
  %v1305 = vadd.f32 %v924, %v1304
  %v1306 = vpop.f32.mrb[0].mxu0
  %v1307 = vadd.f32 %v928, %v1306
  %1308 = vdwg.mxu0
  %v1309 = vtanh.pop %v1063
  %v1310 = vtanh.pop %v1067
  %v1311 = vtanh.pop %v1073
  %v1312 = vtanh.pop %v1077
  %v1313 = vtanh.pop %v1083
  %v1314 = vtanh.pop %v1087
  %v1315 = vtanh.pop %v1093
  %v1316 = vtanh.pop %v1097
  %v1317 = vtanh.pop %v1103
  %v1318 = vtanh.pop %v1107
  %v1319 = vtanh.pop %v1113
  %v1320 = vtanh.pop %v1117
  %v1321 = vtanh.pop %v1123
  %v1322 = vtanh.pop %v1127
  %v1323 = vtanh.pop %v1133
  %v1324 = vtanh.pop %v1137
  %v1325 = vtanh.pop %v1143
  %v1326 = vtanh.pop %v1147
  %v1327 = vtanh.pop %v1153
  %v1328 = vtanh.pop %v1157
  %v1329 = vtanh.pop %v1163
  %v1330 = vtanh.pop %v1167
  %v1331 = vtanh.pop %v1173
  %v1332 = vtanh.pop %v1177
  %v1333 = vtanh.pop %v1183
  %v1334 = vtanh.pop %v1187
  %v1335 = vtanh.pop %v1193
  %v1336 = vtanh.pop %v1197
  %v1337 = vtanh.pop %v1203
  %v1338 = vtanh.pop %v1207
  %v1339 = vtanh.pop %v1213
  %v1340 = vtanh.pop %v1217
  %v1341 = vtanh.pop %v1223
  %v1342 = vtanh.pop %v1227
  %v1343 = vtanh.pop %v1233
  %v1344 = vtanh.pop %v1237
  %v1345 = vtanh.pop %v1243
  %v1346 = vtanh.pop %v1247
  %v1347 = vtanh.pop %v1253
  %v1348 = vtanh.pop %v1257
  %v1349 = vtanh.pop %v1263
  %v1350 = vtanh.pop %v1267
  %v1351 = vtanh.pop %v1273
  %v1352 = vtanh.pop %v1277
  %v1353 = vtanh.pop %v1283
  %v1354 = vtanh.pop %v1287
  %v1355 = vtanh.pop %v1293
  %v1356 = vtanh.pop %v1297
  %v1357 = vtanh.pop %v1303
  %v1358 = vtanh.pop %v1307
  %v1359 = vadd.f32 %v1309, 1.0
  %v1360 = vadd.f32 %v1310, 1.0
  %v1361 = vadd.f32 %v1311, 1.0
  %v1362 = vadd.f32 %v1312, 1.0
  %v1363 = vadd.f32 %v1313, 1.0
  %v1364 = vadd.f32 %v1314, 1.0
  %v1365 = vadd.f32 %v1315, 1.0
  %v1366 = vadd.f32 %v1316, 1.0
  %v1367 = vadd.f32 %v1317, 1.0
  %v1368 = vadd.f32 %v1318, 1.0
  %v1369 = vadd.f32 %v1319, 1.0
  %v1370 = vadd.f32 %v1320, 1.0
  %v1371 = vadd.f32 %v1321, 1.0
  %v1372 = vadd.f32 %v1322, 1.0
  %v1373 = vadd.f32 %v1323, 1.0
  %v1374 = vadd.f32 %v1324, 1.0
  %v1375 = vadd.f32 %v1325, 1.0
  %v1376 = vadd.f32 %v1326, 1.0
  %v1377 = vadd.f32 %v1327, 1.0
  %v1378 = vadd.f32 %v1328, 1.0
  %v1379 = vadd.f32 %v1329, 1.0
  %v1380 = vadd.f32 %v1330, 1.0
  %v1381 = vadd.f32 %v1331, 1.0
  %v1382 = vadd.f32 %v1332, 1.0
  %v1383 = vadd.f32 %v1333, 1.0
  %v1384 = vadd.f32 %v1334, 1.0
  %v1385 = vadd.f32 %v1335, 1.0
  %v1386 = vadd.f32 %v1336, 1.0
  %v1387 = vadd.f32 %v1337, 1.0
  %v1388 = vadd.f32 %v1338, 1.0
  %v1389 = vadd.f32 %v1339, 1.0
  %v1390 = vadd.f32 %v1340, 1.0
  %v1391 = vadd.f32 %v1341, 1.0
  %v1392 = vadd.f32 %v1342, 1.0
  %v1393 = vadd.f32 %v1343, 1.0
  %v1394 = vadd.f32 %v1344, 1.0
  %v1395 = vadd.f32 %v1345, 1.0
  %v1396 = vadd.f32 %v1346, 1.0
  %v1397 = vadd.f32 %v1347, 1.0
  %v1398 = vadd.f32 %v1348, 1.0
  %v1399 = vadd.f32 %v1349, 1.0
  %v1400 = vadd.f32 %v1350, 1.0
  %v1401 = vadd.f32 %v1351, 1.0
  %v1402 = vadd.f32 %v1352, 1.0
  %v1403 = vadd.f32 %v1353, 1.0
  %v1404 = vadd.f32 %v1354, 1.0
  %v1405 = vadd.f32 %v1355, 1.0
  %v1406 = vadd.f32 %v1356, 1.0
  %v1407 = vadd.f32 %v1357, 1.0
  %v1408 = vadd.f32 %v1358, 1.0
  %v1409 = vmul.f32 %v1359, 6.0
  %v1410 = vmul.f32 %v1360, 6.0
  %v1411 = vmul.f32 %v1361, 6.0
  %v1412 = vmul.f32 %v1362, 6.0
  %v1413 = vmul.f32 %v1363, 6.0
  %v1414 = vmul.f32 %v1364, 6.0
  %v1415 = vmul.f32 %v1365, 6.0
  %v1416 = vmul.f32 %v1366, 6.0
  %v1417 = vmul.f32 %v1367, 6.0
  %v1418 = vmul.f32 %v1368, 6.0
  %v1419 = vmul.f32 %v1369, 6.0
  %v1420 = vmul.f32 %v1370, 6.0
  %v1421 = vmul.f32 %v1371, 6.0
  %v1422 = vmul.f32 %v1372, 6.0
  %v1423 = vmul.f32 %v1373, 6.0
  %v1424 = vmul.f32 %v1374, 6.0
  %v1425 = vmul.f32 %v1375, 6.0
  %v1426 = vmul.f32 %v1376, 6.0
  %v1427 = vmul.f32 %v1377, 6.0
  %v1428 = vmul.f32 %v1378, 6.0
  %v1429 = vmul.f32 %v1379, 6.0
  %v1430 = vmul.f32 %v1380, 6.0
  %v1431 = vmul.f32 %v1381, 6.0
  %v1432 = vmul.f32 %v1382, 6.0
  %v1433 = vmul.f32 %v1383, 6.0
  %v1434 = vmul.f32 %v1384, 6.0
  %v1435 = vmul.f32 %v1385, 6.0
  %v1436 = vmul.f32 %v1386, 6.0
  %v1437 = vmul.f32 %v1387, 6.0
  %v1438 = vmul.f32 %v1388, 6.0
  %v1439 = vmul.f32 %v1389, 6.0
  %v1440 = vmul.f32 %v1390, 6.0
  %v1441 = vmul.f32 %v1391, 6.0
  %v1442 = vmul.f32 %v1392, 6.0
  %v1443 = vmul.f32 %v1393, 6.0
  %v1444 = vmul.f32 %v1394, 6.0
  %v1445 = vmul.f32 %v1395, 6.0
  %v1446 = vmul.f32 %v1396, 6.0
  %v1447 = vmul.f32 %v1397, 6.0
  %v1448 = vmul.f32 %v1398, 6.0
  %v1449 = vmul.f32 %v1399, 6.0
  %v1450 = vmul.f32 %v1400, 6.0
  %v1451 = vmul.f32 %v1401, 6.0
  %v1452 = vmul.f32 %v1402, 6.0
  %v1453 = vmul.f32 %v1403, 6.0
  %v1454 = vmul.f32 %v1404, 6.0
  %v1455 = vmul.f32 %v1405, 6.0
  %v1456 = vmul.f32 %v1406, 6.0
  %v1457 = vmul.f32 %v1407, 6.0
  %v1458 = vmul.f32 %v1408, 6.0
  %v1459 = vadd.f32 %v1409, -10.0
  %v1460 = vadd.f32 %v1410, -10.0
  %v1461 = vadd.f32 %v1411, -10.0
  %v1462 = vadd.f32 %v1412, -10.0
  %v1463 = vadd.f32 %v1413, -10.0
  %v1464 = vadd.f32 %v1414, -10.0
  %v1465 = vadd.f32 %v1415, -10.0
  %v1466 = vadd.f32 %v1416, -10.0
  %v1467 = vadd.f32 %v1417, -10.0
  %v1468 = vadd.f32 %v1418, -10.0
  %v1469 = vadd.f32 %v1419, -10.0
  %v1470 = vadd.f32 %v1420, -10.0
  %v1471 = vadd.f32 %v1421, -10.0
  %v1472 = vadd.f32 %v1422, -10.0
  %v1473 = vadd.f32 %v1423, -10.0
  %v1474 = vadd.f32 %v1424, -10.0
  %v1475 = vadd.f32 %v1425, -10.0
  %v1476 = vadd.f32 %v1426, -10.0
  %v1477 = vadd.f32 %v1427, -10.0
  %v1478 = vadd.f32 %v1428, -10.0
  %v1479 = vadd.f32 %v1429, -10.0
  %v1480 = vadd.f32 %v1430, -10.0
  %v1481 = vadd.f32 %v1431, -10.0
  %v1482 = vadd.f32 %v1432, -10.0
  %v1483 = vadd.f32 %v1433, -10.0
  %v1484 = vadd.f32 %v1434, -10.0
  %v1485 = vadd.f32 %v1435, -10.0
  %v1486 = vadd.f32 %v1436, -10.0
  %v1487 = vadd.f32 %v1437, -10.0
  %v1488 = vadd.f32 %v1438, -10.0
  %v1489 = vadd.f32 %v1439, -10.0
  %v1490 = vadd.f32 %v1440, -10.0
  %v1491 = vadd.f32 %v1441, -10.0
  %v1492 = vadd.f32 %v1442, -10.0
  %v1493 = vadd.f32 %v1443, -10.0
  %v1494 = vadd.f32 %v1444, -10.0
  %v1495 = vadd.f32 %v1445, -10.0
  %v1496 = vadd.f32 %v1446, -10.0
  %v1497 = vadd.f32 %v1447, -10.0
  %v1498 = vadd.f32 %v1448, -10.0
  %v1499 = vadd.f32 %v1449, -10.0
  %v1500 = vadd.f32 %v1450, -10.0
  %v1501 = vadd.f32 %v1451, -10.0
  %v1502 = vadd.f32 %v1452, -10.0
  %v1503 = vadd.f32 %v1453, -10.0
  %v1504 = vadd.f32 %v1454, -10.0
  %v1505 = vadd.f32 %v1455, -10.0
  %v1506 = vadd.f32 %v1456, -10.0
  %v1507 = vadd.f32 %v1457, -10.0
  %v1508 = vadd.f32 %v1458, -10.0
  %v1509 = vmul.f32 %v1459, 1.442695
  %v1510 = vpow.pop %v1509
  %v1511 = vmul.f32 %v1460, 1.442695
  %v1512 = vpow.pop %v1511
  %v1513 = vmul.f32 %v1461, 1.442695
  %v1514 = vpow.pop %v1513
  %v1515 = vmul.f32 %v1462, 1.442695
  %v1516 = vpow.pop %v1515
  %v1517 = vmul.f32 %v1463, 1.442695
  %v1518 = vpow.pop %v1517
  %v1519 = vmul.f32 %v1464, 1.442695
  %v1520 = vpow.pop %v1519
  %v1521 = vmul.f32 %v1465, 1.442695
  %v1522 = vpow.pop %v1521
  %v1523 = vmul.f32 %v1466, 1.442695
  %v1524 = vpow.pop %v1523
  %v1525 = vmul.f32 %v1467, 1.442695
  %v1526 = vpow.pop %v1525
  %v1527 = vmul.f32 %v1468, 1.442695
  %v1528 = vpow.pop %v1527
  %v1529 = vmul.f32 %v1469, 1.442695
  %v1530 = vpow.pop %v1529
  %v1531 = vmul.f32 %v1470, 1.442695
  %v1532 = vpow.pop %v1531
  %v1533 = vmul.f32 %v1471, 1.442695
  %v1534 = vpow.pop %v1533
  %v1535 = vmul.f32 %v1472, 1.442695
  %v1536 = vpow.pop %v1535
  %v1537 = vmul.f32 %v1473, 1.442695
  %v1538 = vpow.pop %v1537
  %v1539 = vmul.f32 %v1474, 1.442695
  %v1540 = vpow.pop %v1539
  %v1541 = vmul.f32 %v1475, 1.442695
  %v1542 = vpow.pop %v1541
  %v1543 = vmul.f32 %v1476, 1.442695
  %v1544 = vpow.pop %v1543
  %v1545 = vmul.f32 %v1477, 1.442695
  %v1546 = vpow.pop %v1545
  %v1547 = vmul.f32 %v1478, 1.442695
  %v1548 = vpow.pop %v1547
  %v1549 = vmul.f32 %v1479, 1.442695
  %v1550 = vpow.pop %v1549
  %v1551 = vmul.f32 %v1480, 1.442695
  %v1552 = vpow.pop %v1551
  %v1553 = vmul.f32 %v1481, 1.442695
  %v1554 = vpow.pop %v1553
  %v1555 = vmul.f32 %v1482, 1.442695
  %v1556 = vpow.pop %v1555
  %v1557 = vmul.f32 %v1483, 1.442695
  %v1558 = vpow.pop %v1557
  %v1559 = vmul.f32 %v1484, 1.442695
  %v1560 = vpow.pop %v1559
  %v1561 = vmul.f32 %v1485, 1.442695
  %v1562 = vpow.pop %v1561
  %v1563 = vmul.f32 %v1486, 1.442695
  %v1564 = vpow.pop %v1563
  %v1565 = vmul.f32 %v1487, 1.442695
  %v1566 = vpow.pop %v1565
  %v1567 = vmul.f32 %v1488, 1.442695
  %v1568 = vpow.pop %v1567
  %v1569 = vmul.f32 %v1489, 1.442695
  %v1570 = vpow.pop %v1569
  %v1571 = vmul.f32 %v1490, 1.442695
  %v1572 = vpow.pop %v1571
  %v1573 = vmul.f32 %v1491, 1.442695
  %v1574 = vpow.pop %v1573
  %v1575 = vmul.f32 %v1492, 1.442695
  %v1576 = vpow.pop %v1575
  %v1577 = vmul.f32 %v1493, 1.442695
  %v1578 = vpow.pop %v1577
  %v1579 = vmul.f32 %v1494, 1.442695
  %v1580 = vpow.pop %v1579
  %v1581 = vmul.f32 %v1495, 1.442695
  %v1582 = vpow.pop %v1581
  %v1583 = vmul.f32 %v1496, 1.442695
  %v1584 = vpow.pop %v1583
  %v1585 = vmul.f32 %v1497, 1.442695
  %v1586 = vpow.pop %v1585
  %v1587 = vmul.f32 %v1498, 1.442695
  %v1588 = vpow.pop %v1587
  %v1589 = vmul.f32 %v1499, 1.442695
  %v1590 = vpow.pop %v1589
  %v1591 = vmul.f32 %v1500, 1.442695
  %v1592 = vpow.pop %v1591
  %v1593 = vmul.f32 %v1501, 1.442695
  %v1594 = vpow.pop %v1593
  %v1595 = vmul.f32 %v1502, 1.442695
  %v1596 = vpow.pop %v1595
  %v1597 = vmul.f32 %v1503, 1.442695
  %v1598 = vpow.pop %v1597
  %v1599 = vmul.f32 %v1504, 1.442695
  %v1600 = vpow.pop %v1599
  %v1601 = vmul.f32 %v1505, 1.442695
  %v1602 = vpow.pop %v1601
  %v1603 = vmul.f32 %v1506, 1.442695
  %v1604 = vpow.pop %v1603
  %v1605 = vmul.f32 %v1507, 1.442695
  %v1606 = vpow.pop %v1605
  %v1607 = vmul.f32 %v1508, 1.442695
  %v1608 = vpow.pop %v1607
  %v1609 = vtanh.pop %v1061
  %v1610 = vtanh.pop %v1065
  %v1611 = vtanh.pop %v1071
  %v1612 = vtanh.pop %v1075
  %v1613 = vtanh.pop %v1081
  %v1614 = vtanh.pop %v1085
  %v1615 = vtanh.pop %v1091
  %v1616 = vtanh.pop %v1095
  %v1617 = vtanh.pop %v1101
  %v1618 = vtanh.pop %v1105
  %v1619 = vtanh.pop %v1111
  %v1620 = vtanh.pop %v1115
  %v1621 = vtanh.pop %v1121
  %v1622 = vtanh.pop %v1125
  %v1623 = vtanh.pop %v1131
  %v1624 = vtanh.pop %v1135
  %v1625 = vtanh.pop %v1141
  %v1626 = vtanh.pop %v1145
  %v1627 = vtanh.pop %v1151
  %v1628 = vtanh.pop %v1155
  %v1629 = vtanh.pop %v1161
  %v1630 = vtanh.pop %v1165
  %v1631 = vtanh.pop %v1171
  %v1632 = vtanh.pop %v1175
  %v1633 = vtanh.pop %v1181
  %v1634 = vtanh.pop %v1185
  %v1635 = vtanh.pop %v1191
  %v1636 = vtanh.pop %v1195
  %v1637 = vtanh.pop %v1201
  %v1638 = vtanh.pop %v1205
  %v1639 = vtanh.pop %v1211
  %v1640 = vtanh.pop %v1215
  %v1641 = vtanh.pop %v1221
  %v1642 = vtanh.pop %v1225
  %v1643 = vtanh.pop %v1231
  %v1644 = vtanh.pop %v1235
  %v1645 = vtanh.pop %v1241
  %v1646 = vtanh.pop %v1245
  %v1647 = vtanh.pop %v1251
  %v1648 = vtanh.pop %v1255
  %v1649 = vtanh.pop %v1261
  %v1650 = vtanh.pop %v1265
  %v1651 = vtanh.pop %v1271
  %v1652 = vtanh.pop %v1275
  %v1653 = vtanh.pop %v1281
  %v1654 = vtanh.pop %v1285
  %v1655 = vtanh.pop %v1291
  %v1656 = vtanh.pop %v1295
  %v1657 = vtanh.pop %v1301
  %v1658 = vtanh.pop %v1305
  %v1659 = vpack.c.bf16 %v1065, %v1061
  %v1660 = vpack.c.bf16 %v1075, %v1071
  %v1661 = vpack.c.bf16 %v1085, %v1081
  %v1662 = vpack.c.bf16 %v1095, %v1091
  %v1663 = vpack.c.bf16 %v1105, %v1101
  %v1664 = vpack.c.bf16 %v1115, %v1111
  %v1665 = vpack.c.bf16 %v1125, %v1121
  %v1666 = vpack.c.bf16 %v1135, %v1131
  %v1667 = vpack.c.bf16 %v1145, %v1141
  %v1668 = vpack.c.bf16 %v1155, %v1151
  %v1669 = vpack.c.bf16 %v1165, %v1161
  %v1670 = vpack.c.bf16 %v1175, %v1171
  %v1671 = vpack.c.bf16 %v1185, %v1181
  %v1672 = vpack.c.bf16 %v1195, %v1191
  %v1673 = vpack.c.bf16 %v1205, %v1201
  %v1674 = vpack.c.bf16 %v1215, %v1211
  %v1675 = vpack.c.bf16 %v1225, %v1221
  %v1676 = vpack.c.bf16 %v1235, %v1231
  %v1677 = vpack.c.bf16 %v1245, %v1241
  %v1678 = vpack.c.bf16 %v1255, %v1251
  %v1679 = vpack.c.bf16 %v1265, %v1261
  %v1680 = vpack.c.bf16 %v1275, %v1271
  %v1681 = vpack.c.bf16 %v1285, %v1281
  %v1682 = vpack.c.bf16 %v1295, %v1291
  %v1683 = vpack.c.bf16 %v1305, %v1301
  %v1709 = vunpack.c.l.b16 %v1659
  %v1710 = vunpack.c.h.b16 %v1659
  %v1711 = vunpack.c.l.b16 %v1660
  %v1712 = vunpack.c.h.b16 %v1660
  %v1713 = vunpack.c.l.b16 %v1661
  %v1714 = vunpack.c.h.b16 %v1661
  %v1715 = vunpack.c.l.b16 %v1662
  %v1716 = vunpack.c.h.b16 %v1662
  %v1717 = vunpack.c.l.b16 %v1663
  %v1718 = vunpack.c.h.b16 %v1663
  %v1719 = vunpack.c.l.b16 %v1664
  %v1720 = vunpack.c.h.b16 %v1664
  %v1721 = vunpack.c.l.b16 %v1665
  %v1722 = vunpack.c.h.b16 %v1665
  %v1723 = vunpack.c.l.b16 %v1666
  %v1724 = vunpack.c.h.b16 %v1666
  %v1725 = vunpack.c.l.b16 %v1667
  %v1726 = vunpack.c.h.b16 %v1667
  %v1727 = vunpack.c.l.b16 %v1668
  %v1728 = vunpack.c.h.b16 %v1668
  %v1729 = vunpack.c.l.b16 %v1669
  %v1730 = vunpack.c.h.b16 %v1669
  %v1731 = vunpack.c.l.b16 %v1670
  %v1732 = vunpack.c.h.b16 %v1670
  %v1733 = vunpack.c.l.b16 %v1671
  %v1734 = vunpack.c.h.b16 %v1671
  %v1735 = vunpack.c.l.b16 %v1672
  %v1736 = vunpack.c.h.b16 %v1672
  %v1737 = vunpack.c.l.b16 %v1673
  %v1738 = vunpack.c.h.b16 %v1673
  %v1739 = vunpack.c.l.b16 %v1674
  %v1740 = vunpack.c.h.b16 %v1674
  %v1741 = vunpack.c.l.b16 %v1675
  %v1742 = vunpack.c.h.b16 %v1675
  %v1743 = vunpack.c.l.b16 %v1676
  %v1744 = vunpack.c.h.b16 %v1676
  %v1745 = vunpack.c.l.b16 %v1677
  %v1746 = vunpack.c.h.b16 %v1677
  %v1747 = vunpack.c.l.b16 %v1678
  %v1748 = vunpack.c.h.b16 %v1678
  %v1749 = vunpack.c.l.b16 %v1679
  %v1750 = vunpack.c.h.b16 %v1679
  %v1751 = vunpack.c.l.b16 %v1680
  %v1752 = vunpack.c.h.b16 %v1680
  %v1753 = vunpack.c.l.b16 %v1681
  %v1754 = vunpack.c.h.b16 %v1681
  %v1755 = vunpack.c.l.b16 %v1682
  %v1756 = vunpack.c.h.b16 %v1682
  %v1757 = vunpack.c.l.b16 %v1683
  %v1758 = vunpack.c.h.b16 %v1683
  %v1759 = vpack.c.b16 %v1709, %v1709
  %v1760 = vpack.c.b16 %v1710, %v1710
  %v1761 = vpack.c.b16 %v1711, %v1711
  %v1762 = vpack.c.b16 %v1712, %v1712
  %v1763 = vpack.c.b16 %v1713, %v1713
  %v1764 = vpack.c.b16 %v1714, %v1714
  %v1765 = vpack.c.b16 %v1715, %v1715
  %v1766 = vpack.c.b16 %v1716, %v1716
  %v1767 = vpack.c.b16 %v1717, %v1717
  %v1768 = vpack.c.b16 %v1718, %v1718
  %v1769 = vpack.c.b16 %v1719, %v1719
  %v1770 = vpack.c.b16 %v1720, %v1720
  %v1771 = vpack.c.b16 %v1721, %v1721
  %v1772 = vpack.c.b16 %v1722, %v1722
  %v1773 = vpack.c.b16 %v1723, %v1723
  %v1774 = vpack.c.b16 %v1724, %v1724
  %v1775 = vpack.c.b16 %v1725, %v1725
  %v1776 = vpack.c.b16 %v1726, %v1726
  %v1777 = vpack.c.b16 %v1727, %v1727
  %v1778 = vpack.c.b16 %v1728, %v1728
  %v1779 = vpack.c.b16 %v1729, %v1729
  %v1780 = vpack.c.b16 %v1730, %v1730
  %v1781 = vpack.c.b16 %v1731, %v1731
  %v1782 = vpack.c.b16 %v1732, %v1732
  %v1783 = vpack.c.b16 %v1733, %v1733
  %v1784 = vpack.c.b16 %v1734, %v1734
  %v1785 = vpack.c.b16 %v1735, %v1735
  %v1786 = vpack.c.b16 %v1736, %v1736
  %v1787 = vpack.c.b16 %v1737, %v1737
  %v1788 = vpack.c.b16 %v1738, %v1738
  %v1789 = vpack.c.b16 %v1739, %v1739
  %v1790 = vpack.c.b16 %v1740, %v1740
  %v1791 = vpack.c.b16 %v1741, %v1741
  %v1792 = vpack.c.b16 %v1742, %v1742
  %v1793 = vpack.c.b16 %v1743, %v1743
  %v1794 = vpack.c.b16 %v1744, %v1744
  %v1795 = vpack.c.b16 %v1745, %v1745
  %v1796 = vpack.c.b16 %v1746, %v1746
  %v1797 = vpack.c.b16 %v1747, %v1747
  %v1798 = vpack.c.b16 %v1748, %v1748
  %v1799 = vpack.c.b16 %v1749, %v1749
  %v1800 = vpack.c.b16 %v1750, %v1750
  %v1801 = vpack.c.b16 %v1751, %v1751
  %v1802 = vpack.c.b16 %v1752, %v1752
  %v1803 = vpack.c.b16 %v1753, %v1753
  %v1804 = vpack.c.b16 %v1754, %v1754
  %v1805 = vpack.c.b16 %v1755, %v1755
  %v1806 = vpack.c.b16 %v1756, %v1756
  %v1807 = vpack.c.b16 %v1757, %v1757
  %v1808 = vpack.c.b16 %v1758, %v1758
  %1859 = vst [vmem:[%s7] sm:$0xf] %v1759
  %1860 = vst [vmem:[%s7 + $0xc] sm:$0xf] %v1760
  %1861 = vst [vmem:[%s7 + $0x18] sm:$0xf] %v1761
  %1862 = vst [vmem:[%s7 + $0x24] sm:$0xf] %v1762
  %1863 = vst [vmem:[%s7 + $0x30] sm:$0xf] %v1763
  %1864 = vst [vmem:[%s7 + $0x3c] sm:$0xf] %v1764
  %1865 = vst [vmem:[%s7 + $0x48] sm:$0xf] %v1765
  %1866 = vst [vmem:[%s7 + $0x54] sm:$0xf] %v1766
  %1867 = vst [vmem:[%s7 + $0x60] sm:$0xf] %v1767
  %1868 = vst [vmem:[%s7 + $0x6c] sm:$0xf] %v1768
  %1869 = vst [vmem:[%s7 + $0x78] sm:$0xf] %v1769
  %1870 = vst [vmem:[%s7 + $0x84] sm:$0xf] %v1770
  %1871 = vst [vmem:[%s7 + $0x90] sm:$0xf] %v1771
  %1872 = vst [vmem:[%s7 + $0x9c] sm:$0xf] %v1772
  %1873 = vst [vmem:[%s7 + $0xa8] sm:$0xf] %v1773
  %1874 = vst [vmem:[%s7 + $0xb4] sm:$0xf] %v1774
  %1875 = vst [vmem:[%s7 + $0xc0] sm:$0xf] %v1775
  %1876 = vst [vmem:[%s7 + $0xcc] sm:$0xf] %v1776
  %1877 = vst [vmem:[%s7 + $0xd8] sm:$0xf] %v1777
  %1878 = vst [vmem:[%s7 + $0xe4] sm:$0xf] %v1778
  %1879 = vst [vmem:[%s7 + $0xf0] sm:$0xf] %v1779
  %1880 = vst [vmem:[%s7 + $0xfc] sm:$0xf] %v1780
  %1881 = vst [vmem:[%s7 + $0x108] sm:$0xf] %v1781
  %1882 = vst [vmem:[%s7 + $0x114] sm:$0xf] %v1782
  %1883 = vst [vmem:[%s7 + $0x120] sm:$0xf] %v1783
  %1884 = vst [vmem:[%s7 + $0x12c] sm:$0xf] %v1784
  %1885 = vst [vmem:[%s7 + $0x138] sm:$0xf] %v1785
  %1886 = vst [vmem:[%s7 + $0x144] sm:$0xf] %v1786
  %1887 = vst [vmem:[%s7 + $0x150] sm:$0xf] %v1787
  %1888 = vst [vmem:[%s7 + $0x15c] sm:$0xf] %v1788
  %1889 = vst [vmem:[%s7 + $0x168] sm:$0xf] %v1789
  %1890 = vst [vmem:[%s7 + $0x174] sm:$0xf] %v1790
  %1891 = vst [vmem:[%s7 + $0x180] sm:$0xf] %v1791
  %1892 = vst [vmem:[%s7 + $0x18c] sm:$0xf] %v1792
  %1893 = vst [vmem:[%s7 + $0x198] sm:$0xf] %v1793
  %1894 = vst [vmem:[%s7 + $0x1a4] sm:$0xf] %v1794
  %1895 = vst [vmem:[%s7 + $0x1b0] sm:$0xf] %v1795
  %1896 = vst [vmem:[%s7 + $0x1bc] sm:$0xf] %v1796
  %1897 = vst [vmem:[%s7 + $0x1c8] sm:$0xf] %v1797
  %1898 = vst [vmem:[%s7 + $0x1d4] sm:$0xf] %v1798
  %1899 = vst [vmem:[%s7 + $0x1e0] sm:$0xf] %v1799
  %1900 = vst [vmem:[%s7 + $0x1ec] sm:$0xf] %v1800
  %1901 = vst [vmem:[%s7 + $0x1f8] sm:$0xf] %v1801
  %1902 = vst [vmem:[%s7 + $0x204] sm:$0xf] %v1802
  %1903 = vst [vmem:[%s7 + $0x210] sm:$0xf] %v1803
  %1904 = vst [vmem:[%s7 + $0x21c] sm:$0xf] %v1804
  %1905 = vst [vmem:[%s7 + $0x228] sm:$0xf] %v1805
  %1906 = vst [vmem:[%s7 + $0x234] sm:$0xf] %v1806
  %1907 = vst [vmem:[%s7 + $0x240] sm:$0xf] %v1807
  %1908 = vst [vmem:[%s7 + $0x24c] sm:$0xf] %v1808
  %v1909 = vpack.c.bf16 %v1512, %v1510
  %v1910 = vpack.c.bf16 %v1516, %v1514
  %v1911 = vpack.c.bf16 %v1520, %v1518
  %v1912 = vpack.c.bf16 %v1524, %v1522
  %v1913 = vpack.c.bf16 %v1528, %v1526
  %v1914 = vpack.c.bf16 %v1532, %v1530
  %v1915 = vpack.c.bf16 %v1536, %v1534
  %v1916 = vpack.c.bf16 %v1540, %v1538
  %v1917 = vpack.c.bf16 %v1544, %v1542
  %v1918 = vpack.c.bf16 %v1548, %v1546
  %v1919 = vpack.c.bf16 %v1552, %v1550
  %v1920 = vpack.c.bf16 %v1556, %v1554
  %v1921 = vpack.c.bf16 %v1560, %v1558
  %v1922 = vpack.c.bf16 %v1564, %v1562
  %v1923 = vpack.c.bf16 %v1568, %v1566
  %v1924 = vpack.c.bf16 %v1572, %v1570
  %v1925 = vpack.c.bf16 %v1576, %v1574
  %v1926 = vpack.c.bf16 %v1580, %v1578
  %v1927 = vpack.c.bf16 %v1584, %v1582
  %v1928 = vpack.c.bf16 %v1588, %v1586
  %v1929 = vpack.c.bf16 %v1592, %v1590
  %v1930 = vpack.c.bf16 %v1596, %v1594
  %v1931 = vpack.c.bf16 %v1600, %v1598
  %v1932 = vpack.c.bf16 %v1604, %v1602
  %v1933 = vpack.c.bf16 %v1608, %v1606
  %v1959 = vunpack.c.l.b16 %v1909
  %v1960 = vunpack.c.h.b16 %v1909
  %v1961 = vunpack.c.l.b16 %v1910
  %v1962 = vunpack.c.h.b16 %v1910
  %v1963 = vunpack.c.l.b16 %v1911
  %v1964 = vunpack.c.h.b16 %v1911
  %v1965 = vunpack.c.l.b16 %v1912
  %v1966 = vunpack.c.h.b16 %v1912
  %v1967 = vunpack.c.l.b16 %v1913
  %v1968 = vunpack.c.h.b16 %v1913
  %v1969 = vunpack.c.l.b16 %v1914
  %v1970 = vunpack.c.h.b16 %v1914
  %v1971 = vunpack.c.l.b16 %v1915
  %v1972 = vunpack.c.h.b16 %v1915
  %v1973 = vunpack.c.l.b16 %v1916
  %v1974 = vunpack.c.h.b16 %v1916
  %v1975 = vunpack.c.l.b16 %v1917
  %v1976 = vunpack.c.h.b16 %v1917
  %v1977 = vunpack.c.l.b16 %v1918
  %v1978 = vunpack.c.h.b16 %v1918
  %v1979 = vunpack.c.l.b16 %v1919
  %v1980 = vunpack.c.h.b16 %v1919
  %v1981 = vunpack.c.l.b16 %v1920
  %v1982 = vunpack.c.h.b16 %v1920
  %v1983 = vunpack.c.l.b16 %v1921
  %v1984 = vunpack.c.h.b16 %v1921
  %v1985 = vunpack.c.l.b16 %v1922
  %v1986 = vunpack.c.h.b16 %v1922
  %v1987 = vunpack.c.l.b16 %v1923
  %v1988 = vunpack.c.h.b16 %v1923
  %v1989 = vunpack.c.l.b16 %v1924
  %v1990 = vunpack.c.h.b16 %v1924
  %v1991 = vunpack.c.l.b16 %v1925
  %v1992 = vunpack.c.h.b16 %v1925
  %v1993 = vunpack.c.l.b16 %v1926
  %v1994 = vunpack.c.h.b16 %v1926
  %v1995 = vunpack.c.l.b16 %v1927
  %v1996 = vunpack.c.h.b16 %v1927
  %v1997 = vunpack.c.l.b16 %v1928
  %v1998 = vunpack.c.h.b16 %v1928
  %v1999 = vunpack.c.l.b16 %v1929
  %v2000 = vunpack.c.h.b16 %v1929
  %v2001 = vunpack.c.l.b16 %v1930
  %v2002 = vunpack.c.h.b16 %v1930
  %v2003 = vunpack.c.l.b16 %v1931
  %v2004 = vunpack.c.h.b16 %v1931
  %v2005 = vunpack.c.l.b16 %v1932
  %v2006 = vunpack.c.h.b16 %v1932
  %v2007 = vunpack.c.l.b16 %v1933
  %v2008 = vunpack.c.h.b16 %v1933
  %v2009 = vpack.c.b16 %v1959, %v1959
  %v2010 = vpack.c.b16 %v1960, %v1960
  %v2011 = vpack.c.b16 %v1961, %v1961
  %v2012 = vpack.c.b16 %v1962, %v1962
  %v2013 = vpack.c.b16 %v1963, %v1963
  %v2014 = vpack.c.b16 %v1964, %v1964
  %v2015 = vpack.c.b16 %v1965, %v1965
  %v2016 = vpack.c.b16 %v1966, %v1966
  %v2017 = vpack.c.b16 %v1967, %v1967
  %v2018 = vpack.c.b16 %v1968, %v1968
  %v2019 = vpack.c.b16 %v1969, %v1969
  %v2020 = vpack.c.b16 %v1970, %v1970
  %v2021 = vpack.c.b16 %v1971, %v1971
  %v2022 = vpack.c.b16 %v1972, %v1972
  %v2023 = vpack.c.b16 %v1973, %v1973
  %v2024 = vpack.c.b16 %v1974, %v1974
  %v2025 = vpack.c.b16 %v1975, %v1975
  %v2026 = vpack.c.b16 %v1976, %v1976
  %v2027 = vpack.c.b16 %v1977, %v1977
  %v2028 = vpack.c.b16 %v1978, %v1978
  %v2029 = vpack.c.b16 %v1979, %v1979
  %v2030 = vpack.c.b16 %v1980, %v1980
  %v2031 = vpack.c.b16 %v1981, %v1981
  %v2032 = vpack.c.b16 %v1982, %v1982
  %v2033 = vpack.c.b16 %v1983, %v1983
  %v2034 = vpack.c.b16 %v1984, %v1984
  %v2035 = vpack.c.b16 %v1985, %v1985
  %v2036 = vpack.c.b16 %v1986, %v1986
  %v2037 = vpack.c.b16 %v1987, %v1987
  %v2038 = vpack.c.b16 %v1988, %v1988
  %v2039 = vpack.c.b16 %v1989, %v1989
  %v2040 = vpack.c.b16 %v1990, %v1990
  %v2041 = vpack.c.b16 %v1991, %v1991
  %v2042 = vpack.c.b16 %v1992, %v1992
  %v2043 = vpack.c.b16 %v1993, %v1993
  %v2044 = vpack.c.b16 %v1994, %v1994
  %v2045 = vpack.c.b16 %v1995, %v1995
  %v2046 = vpack.c.b16 %v1996, %v1996
  %v2047 = vpack.c.b16 %v1997, %v1997
  %v2048 = vpack.c.b16 %v1998, %v1998
  %v2049 = vpack.c.b16 %v1999, %v1999
  %v2050 = vpack.c.b16 %v2000, %v2000
  %v2051 = vpack.c.b16 %v2001, %v2001
  %v2052 = vpack.c.b16 %v2002, %v2002
  %v2053 = vpack.c.b16 %v2003, %v2003
  %v2054 = vpack.c.b16 %v2004, %v2004
  %v2055 = vpack.c.b16 %v2005, %v2005
  %v2056 = vpack.c.b16 %v2006, %v2006
  %v2057 = vpack.c.b16 %v2007, %v2007
  %v2058 = vpack.c.b16 %v2008, %v2008
  %2109 = vst [vmem:[%s7 + $0x4] sm:$0xf] %v2009
  %2110 = vst [vmem:[%s7 + $0x10] sm:$0xf] %v2010
  %2111 = vst [vmem:[%s7 + $0x1c] sm:$0xf] %v2011
  %2112 = vst [vmem:[%s7 + $0x28] sm:$0xf] %v2012
  %2113 = vst [vmem:[%s7 + $0x34] sm:$0xf] %v2013
  %2114 = vst [vmem:[%s7 + $0x40] sm:$0xf] %v2014
  %2115 = vst [vmem:[%s7 + $0x4c] sm:$0xf] %v2015
  %2116 = vst [vmem:[%s7 + $0x58] sm:$0xf] %v2016
  %2117 = vst [vmem:[%s7 + $0x64] sm:$0xf] %v2017
  %2118 = vst [vmem:[%s7 + $0x70] sm:$0xf] %v2018
  %2119 = vst [vmem:[%s7 + $0x7c] sm:$0xf] %v2019
  %2120 = vst [vmem:[%s7 + $0x88] sm:$0xf] %v2020
  %2121 = vst [vmem:[%s7 + $0x94] sm:$0xf] %v2021
  %2122 = vst [vmem:[%s7 + $0xa0] sm:$0xf] %v2022
  %2123 = vst [vmem:[%s7 + $0xac] sm:$0xf] %v2023
  %2124 = vst [vmem:[%s7 + $0xb8] sm:$0xf] %v2024
  %2125 = vst [vmem:[%s7 + $0xc4] sm:$0xf] %v2025
  %2126 = vst [vmem:[%s7 + $0xd0] sm:$0xf] %v2026
  %2127 = vst [vmem:[%s7 + $0xdc] sm:$0xf] %v2027
  %2128 = vst [vmem:[%s7 + $0xe8] sm:$0xf] %v2028
  %2129 = vst [vmem:[%s7 + $0xf4] sm:$0xf] %v2029
  %2130 = vst [vmem:[%s7 + $0x100] sm:$0xf] %v2030
  %2131 = vst [vmem:[%s7 + $0x10c] sm:$0xf] %v2031
  %2132 = vst [vmem:[%s7 + $0x118] sm:$0xf] %v2032
  %2133 = vst [vmem:[%s7 + $0x124] sm:$0xf] %v2033
  %2134 = vst [vmem:[%s7 + $0x130] sm:$0xf] %v2034
  %2135 = vst [vmem:[%s7 + $0x13c] sm:$0xf] %v2035
  %2136 = vst [vmem:[%s7 + $0x148] sm:$0xf] %v2036
  %2137 = vst [vmem:[%s7 + $0x154] sm:$0xf] %v2037
  %2138 = vst [vmem:[%s7 + $0x160] sm:$0xf] %v2038
  %2139 = vst [vmem:[%s7 + $0x16c] sm:$0xf] %v2039
  %2140 = vst [vmem:[%s7 + $0x178] sm:$0xf] %v2040
  %2141 = vst [vmem:[%s7 + $0x184] sm:$0xf] %v2041
  %2142 = vst [vmem:[%s7 + $0x190] sm:$0xf] %v2042
  %2143 = vst [vmem:[%s7 + $0x19c] sm:$0xf] %v2043
  %2144 = vst [vmem:[%s7 + $0x1a8] sm:$0xf] %v2044
  %2145 = vst [vmem:[%s7 + $0x1b4] sm:$0xf] %v2045
  %2146 = vst [vmem:[%s7 + $0x1c0] sm:$0xf] %v2046
  %2147 = vst [vmem:[%s7 + $0x1cc] sm:$0xf] %v2047
  %2148 = vst [vmem:[%s7 + $0x1d8] sm:$0xf] %v2048
  %2149 = vst [vmem:[%s7 + $0x1e4] sm:$0xf] %v2049
  %2150 = vst [vmem:[%s7 + $0x1f0] sm:$0xf] %v2050
  %2151 = vst [vmem:[%s7 + $0x1fc] sm:$0xf] %v2051
  %2152 = vst [vmem:[%s7 + $0x208] sm:$0xf] %v2052
  %2153 = vst [vmem:[%s7 + $0x214] sm:$0xf] %v2053
  %2154 = vst [vmem:[%s7 + $0x220] sm:$0xf] %v2054
  %2155 = vst [vmem:[%s7 + $0x22c] sm:$0xf] %v2055
  %2156 = vst [vmem:[%s7 + $0x238] sm:$0xf] %v2056
  %2157 = vst [vmem:[%s7 + $0x244] sm:$0xf] %v2057
  %2158 = vst [vmem:[%s7 + $0x250] sm:$0xf] %v2058
  %v2159 = vpack.c.bf16 %v1610, %v1609
  %v2160 = vpack.c.bf16 %v1612, %v1611
  %v2161 = vpack.c.bf16 %v1614, %v1613
  %v2162 = vpack.c.bf16 %v1616, %v1615
  %v2163 = vpack.c.bf16 %v1618, %v1617
  %v2164 = vpack.c.bf16 %v1620, %v1619
  %v2165 = vpack.c.bf16 %v1622, %v1621
  %v2166 = vpack.c.bf16 %v1624, %v1623
  %v2167 = vpack.c.bf16 %v1626, %v1625
  %v2168 = vpack.c.bf16 %v1628, %v1627
  %v2169 = vpack.c.bf16 %v1630, %v1629
  %v2170 = vpack.c.bf16 %v1632, %v1631
  %v2171 = vpack.c.bf16 %v1634, %v1633
  %v2172 = vpack.c.bf16 %v1636, %v1635
  %v2173 = vpack.c.bf16 %v1638, %v1637
  %v2174 = vpack.c.bf16 %v1640, %v1639
  %v2175 = vpack.c.bf16 %v1642, %v1641
  %v2176 = vpack.c.bf16 %v1644, %v1643
  %v2177 = vpack.c.bf16 %v1646, %v1645
  %v2178 = vpack.c.bf16 %v1648, %v1647
  %v2179 = vpack.c.bf16 %v1650, %v1649
  %v2180 = vpack.c.bf16 %v1652, %v1651
  %v2181 = vpack.c.bf16 %v1654, %v1653
  %v2182 = vpack.c.bf16 %v1656, %v1655
  %v2183 = vpack.c.bf16 %v1658, %v1657
  %v2209 = vunpack.c.l.b16 %v2159
  %v2210 = vunpack.c.h.b16 %v2159
  %v2211 = vunpack.c.l.b16 %v2160
  %v2212 = vunpack.c.h.b16 %v2160
  %v2213 = vunpack.c.l.b16 %v2161
  %v2214 = vunpack.c.h.b16 %v2161
  %v2215 = vunpack.c.l.b16 %v2162
  %v2216 = vunpack.c.h.b16 %v2162
  %v2217 = vunpack.c.l.b16 %v2163
  %v2218 = vunpack.c.h.b16 %v2163
  %v2219 = vunpack.c.l.b16 %v2164
  %v2220 = vunpack.c.h.b16 %v2164
  %v2221 = vunpack.c.l.b16 %v2165
  %v2222 = vunpack.c.h.b16 %v2165
  %v2223 = vunpack.c.l.b16 %v2166
  %v2224 = vunpack.c.h.b16 %v2166
  %v2225 = vunpack.c.l.b16 %v2167
  %v2226 = vunpack.c.h.b16 %v2167
  %v2227 = vunpack.c.l.b16 %v2168
  %v2228 = vunpack.c.h.b16 %v2168
  %v2229 = vunpack.c.l.b16 %v2169
  %v2230 = vunpack.c.h.b16 %v2169
  %v2231 = vunpack.c.l.b16 %v2170
  %v2232 = vunpack.c.h.b16 %v2170
  %v2233 = vunpack.c.l.b16 %v2171
  %v2234 = vunpack.c.h.b16 %v2171
  %v2235 = vunpack.c.l.b16 %v2172
  %v2236 = vunpack.c.h.b16 %v2172
  %v2237 = vunpack.c.l.b16 %v2173
  %v2238 = vunpack.c.h.b16 %v2173
  %v2239 = vunpack.c.l.b16 %v2174
  %v2240 = vunpack.c.h.b16 %v2174
  %v2241 = vunpack.c.l.b16 %v2175
  %v2242 = vunpack.c.h.b16 %v2175
  %v2243 = vunpack.c.l.b16 %v2176
  %v2244 = vunpack.c.h.b16 %v2176
  %v2245 = vunpack.c.l.b16 %v2177
  %v2246 = vunpack.c.h.b16 %v2177
  %v2247 = vunpack.c.l.b16 %v2178
  %v2248 = vunpack.c.h.b16 %v2178
  %v2249 = vunpack.c.l.b16 %v2179
  %v2250 = vunpack.c.h.b16 %v2179
  %v2251 = vunpack.c.l.b16 %v2180
  %v2252 = vunpack.c.h.b16 %v2180
  %v2253 = vunpack.c.l.b16 %v2181
  %v2254 = vunpack.c.h.b16 %v2181
  %v2255 = vunpack.c.l.b16 %v2182
  %v2256 = vunpack.c.h.b16 %v2182
  %v2257 = vunpack.c.l.b16 %v2183
  %v2258 = vunpack.c.h.b16 %v2183
  %v2259 = vpack.c.b16 %v2209, %v2209
  %v2260 = vpack.c.b16 %v2210, %v2210
  %v2261 = vpack.c.b16 %v2211, %v2211
  %v2262 = vpack.c.b16 %v2212, %v2212
  %v2263 = vpack.c.b16 %v2213, %v2213
  %v2264 = vpack.c.b16 %v2214, %v2214
  %v2265 = vpack.c.b16 %v2215, %v2215
  %v2266 = vpack.c.b16 %v2216, %v2216
  %v2267 = vpack.c.b16 %v2217, %v2217
  %v2268 = vpack.c.b16 %v2218, %v2218
  %v2269 = vpack.c.b16 %v2219, %v2219
  %v2270 = vpack.c.b16 %v2220, %v2220
  %v2271 = vpack.c.b16 %v2221, %v2221
  %v2272 = vpack.c.b16 %v2222, %v2222
  %v2273 = vpack.c.b16 %v2223, %v2223
  %v2274 = vpack.c.b16 %v2224, %v2224
  %v2275 = vpack.c.b16 %v2225, %v2225
  %v2276 = vpack.c.b16 %v2226, %v2226
  %v2277 = vpack.c.b16 %v2227, %v2227
  %v2278 = vpack.c.b16 %v2228, %v2228
  %v2279 = vpack.c.b16 %v2229, %v2229
  %v2280 = vpack.c.b16 %v2230, %v2230
  %v2281 = vpack.c.b16 %v2231, %v2231
  %v2282 = vpack.c.b16 %v2232, %v2232
  %v2283 = vpack.c.b16 %v2233, %v2233
  %v2284 = vpack.c.b16 %v2234, %v2234
  %v2285 = vpack.c.b16 %v2235, %v2235
  %v2286 = vpack.c.b16 %v2236, %v2236
  %v2287 = vpack.c.b16 %v2237, %v2237
  %v2288 = vpack.c.b16 %v2238, %v2238
  %v2289 = vpack.c.b16 %v2239, %v2239
  %v2290 = vpack.c.b16 %v2240, %v2240
  %v2291 = vpack.c.b16 %v2241, %v2241
  %v2292 = vpack.c.b16 %v2242, %v2242
  %v2293 = vpack.c.b16 %v2243, %v2243
  %v2294 = vpack.c.b16 %v2244, %v2244
  %v2295 = vpack.c.b16 %v2245, %v2245
  %v2296 = vpack.c.b16 %v2246, %v2246
  %v2297 = vpack.c.b16 %v2247, %v2247
  %v2298 = vpack.c.b16 %v2248, %v2248
  %v2299 = vpack.c.b16 %v2249, %v2249
  %v2300 = vpack.c.b16 %v2250, %v2250
  %v2301 = vpack.c.b16 %v2251, %v2251
  %v2302 = vpack.c.b16 %v2252, %v2252
  %v2303 = vpack.c.b16 %v2253, %v2253
  %v2304 = vpack.c.b16 %v2254, %v2254
  %v2305 = vpack.c.b16 %v2255, %v2255
  %v2306 = vpack.c.b16 %v2256, %v2256
  %v2307 = vpack.c.b16 %v2257, %v2257
  %v2308 = vpack.c.b16 %v2258, %v2258
  %2359 = vst [vmem:[%s7 + $0x8] sm:$0xf] %v2259
  %2360 = vst [vmem:[%s7 + $0x14] sm:$0xf] %v2260
  %2361 = vst [vmem:[%s7 + $0x20] sm:$0xf] %v2261
  %2362 = vst [vmem:[%s7 + $0x2c] sm:$0xf] %v2262
  %2363 = vst [vmem:[%s7 + $0x38] sm:$0xf] %v2263
  %2364 = vst [vmem:[%s7 + $0x44] sm:$0xf] %v2264
  %2365 = vst [vmem:[%s7 + $0x50] sm:$0xf] %v2265
  %2366 = vst [vmem:[%s7 + $0x5c] sm:$0xf] %v2266
  %2367 = vst [vmem:[%s7 + $0x68] sm:$0xf] %v2267
  %2368 = vst [vmem:[%s7 + $0x74] sm:$0xf] %v2268
  %2369 = vst [vmem:[%s7 + $0x80] sm:$0xf] %v2269
  %2370 = vst [vmem:[%s7 + $0x8c] sm:$0xf] %v2270
  %2371 = vst [vmem:[%s7 + $0x98] sm:$0xf] %v2271
  %2372 = vst [vmem:[%s7 + $0xa4] sm:$0xf] %v2272
  %2373 = vst [vmem:[%s7 + $0xb0] sm:$0xf] %v2273
  %2374 = vst [vmem:[%s7 + $0xbc] sm:$0xf] %v2274
  %2375 = vst [vmem:[%s7 + $0xc8] sm:$0xf] %v2275
  %2376 = vst [vmem:[%s7 + $0xd4] sm:$0xf] %v2276
  %2377 = vst [vmem:[%s7 + $0xe0] sm:$0xf] %v2277
  %2378 = vst [vmem:[%s7 + $0xec] sm:$0xf] %v2278
  %2379 = vst [vmem:[%s7 + $0xf8] sm:$0xf] %v2279
  %2380 = vst [vmem:[%s7 + $0x104] sm:$0xf] %v2280
  %2381 = vst [vmem:[%s7 + $0x110] sm:$0xf] %v2281
  %2382 = vst [vmem:[%s7 + $0x11c] sm:$0xf] %v2282
  %2383 = vst [vmem:[%s7 + $0x128] sm:$0xf] %v2283
  %2384 = vst [vmem:[%s7 + $0x134] sm:$0xf] %v2284
  %2385 = vst [vmem:[%s7 + $0x140] sm:$0xf] %v2285
  %2386 = vst [vmem:[%s7 + $0x14c] sm:$0xf] %v2286
  %2387 = vst [vmem:[%s7 + $0x158] sm:$0xf] %v2287
  %2388 = vst [vmem:[%s7 + $0x164] sm:$0xf] %v2288
  %2389 = vst [vmem:[%s7 + $0x170] sm:$0xf] %v2289
  %2390 = vst [vmem:[%s7 + $0x17c] sm:$0xf] %v2290
  %2391 = vst [vmem:[%s7 + $0x188] sm:$0xf] %v2291
  %2392 = vst [vmem:[%s7 + $0x194] sm:$0xf] %v2292
  %2393 = vst [vmem:[%s7 + $0x1a0] sm:$0xf] %v2293
  %2394 = vst [vmem:[%s7 + $0x1ac] sm:$0xf] %v2294
  %2395 = vst [vmem:[%s7 + $0x1b8] sm:$0xf] %v2295
  %2396 = vst [vmem:[%s7 + $0x1c4] sm:$0xf] %v2296
  %2397 = vst [vmem:[%s7 + $0x1d0] sm:$0xf] %v2297
  %2398 = vst [vmem:[%s7 + $0x1dc] sm:$0xf] %v2298
  %2399 = vst [vmem:[%s7 + $0x1e8] sm:$0xf] %v2299
  %2400 = vst [vmem:[%s7 + $0x1f4] sm:$0xf] %v2300
  %2401 = vst [vmem:[%s7 + $0x200] sm:$0xf] %v2301
  %2402 = vst [vmem:[%s7 + $0x20c] sm:$0xf] %v2302
  %2403 = vst [vmem:[%s7 + $0x218] sm:$0xf] %v2303
  %2404 = vst [vmem:[%s7 + $0x224] sm:$0xf] %v2304
  %2405 = vst [vmem:[%s7 + $0x230] sm:$0xf] %v2305
  %2406 = vst [vmem:[%s7 + $0x23c] sm:$0xf] %v2306
  %2407 = vst [vmem:[%s7 + $0x248] sm:$0xf] %v2307
  %2408 = vst [vmem:[%s7 + $0x254] sm:$0xf] %v2308
  // Predicated region
  $region30: #{diag_gaussian_actor_forward.1} parent=0 // pred_check
    _
  $region31: #{diag_gaussian_actor_forward.1} parent=0 // pred_check_branch
    %2410 = sbr.rel (0) target = $region33
  $region32: #{diag_gaussian_actor_forward.1} parent=0 // pred_region
    _
  $region33: #{diag_gaussian_actor_forward.1} parent=0 // pred_fallthru
    _
  // Predicated region
  $region34: #{diag_gaussian_actor_forward.1} parent=0 // pred_check
    _
  $region35: #{diag_gaussian_actor_forward.1} parent=0 // pred_check_branch
    %2412 = sbr.rel (0) target = $region37
  $region36: #{diag_gaussian_actor_forward.1} parent=0 // pred_region
    _
  $region37: #{diag_gaussian_actor_forward.1} parent=0 // pred_fallthru
    _

</llo_original>
